<compile_context>
chip_gen: v7x
topology: tpu7x:2x2x1
jax: 0.10.0
libtpu: 0.0.40
codegen_flags: <defaults>
</compile_context>

<pallas_src>
import jax
import jax.numpy as jnp
from jax.experimental import pallas as pl
from jax.experimental.pallas import tpu as pltpu

BN_EPS = 1e-5
HIDDEN = (200, 100, 50, 2)   # loss_balancer layer widths


# ----------------------------- math helpers --------------------------------

def _log_softmax(z):
    m = jnp.max(z, axis=-1, keepdims=True)
    zs = z - m
    return zs - jnp.log(jnp.sum(jnp.exp(zs), axis=-1, keepdims=True))


def _bn_relu(h):
    # nn.BatchNorm1d, training mode, biased batch variance, gamma=1, beta=0.
    # Two-pass statistics (matches the reference exactly; no cancellation).
    mean = jnp.mean(h, axis=0, keepdims=True)
    hc = h - mean
    var = jnp.mean(hc * hc, axis=0, keepdims=True)
    return jnp.maximum(hc * jax.lax.rsqrt(var + BN_EPS), 0.0)


# --------------------------- parameter slab layout --------------------------

def _align(n, m):
    return ((n + m - 1) // m) * m


def _build_w_layout(num_classes):
    """Row offsets inside the bf16 weight slab; every section starts on a
    16-row boundary (native bf16 sublane tile) so in-kernel static slices stay
    tile-aligned."""
    off, r = {}, 0
    off["w1a"] = r; r += _align(num_classes, 16)   # student half of W1 [C, 200]
    off["w1b"] = r; r += _align(num_classes, 16)   # teacher half of W1 [C, 200]
    off["w2"] = r;  r += _align(HIDDEN[0], 16)     # [200, 100]
    off["w3"] = r;  r += _align(HIDDEN[1], 16)     # [100, 50]
    off["w4"] = r;  r += _align(HIDDEN[2], 16)     # [50, 2]
    n_rows = _align(r, 16)
    width = max(HIDDEN[0], num_classes)
    return off, n_rows, width


def _pack_slabs(params, cls_num_list, num_classes):
    """Pack weights into one bf16 slab and biases + log-prior into a tiny f32
    slab.  Runs once at module construction."""
    C = num_classes
    off, n_rows, width = _build_w_layout(C)

    wslab = jnp.zeros((n_rows, width), jnp.bfloat16)
    w1 = params["w1"].astype(jnp.float32)
    wslab = wslab.at[off["w1a"]:off["w1a"] + C, 0:HIDDEN[0]].set(w1[:C].astype(jnp.bfloat16))
    wslab = wslab.at[off["w1b"]:off["w1b"] + C, 0:HIDDEN[0]].set(w1[C:].astype(jnp.bfloat16))
    wslab = wslab.at[off["w2"]:off["w2"] + HIDDEN[0], 0:HIDDEN[1]].set(
        params["w2"].astype(jnp.bfloat16))
    wslab = wslab.at[off["w3"]:off["w3"] + HIDDEN[1], 0:HIDDEN[2]].set(
        params["w3"].astype(jnp.bfloat16))
    wslab = wslab.at[off["w4"]:off["w4"] + HIDDEN[2], 0:HIDDEN[3]].set(
        params["w4"].astype(jnp.bfloat16))

    # small f32 slab: row 0..3 = b1..b4, row 4 = class log-prior.
    small = jnp.zeros((8, width), jnp.float32)
    small = small.at[0, 0:HIDDEN[0]].set(params["b1"].reshape(-1).astype(jnp.float32))
    small = small.at[1, 0:HIDDEN[1]].set(params["b2"].reshape(-1).astype(jnp.float32))
    small = small.at[2, 0:HIDDEN[2]].set(params["b3"].reshape(-1).astype(jnp.float32))
    small = small.at[3, 0:HIDDEN[3]].set(params["b4"].reshape(-1).astype(jnp.float32))
    log_prior = jnp.log(cls_num_list / jnp.sum(cls_num_list)).astype(jnp.float32)
    small = small.at[4, 0:C].set(log_prior)
    return wslab, small, off, n_rows, width


# ------------------------------- module factory ------------------------------

def make_micro_attention_factor_ver2(num_classes, cls_num_list, params, batch_hint=8):
    """Returns a jitted forward(logits, teacher_logits) -> scalar loss."""
    C = num_classes
    wslab, small, off, n_rows, width = _pack_slabs(params, cls_num_list, C)

    def kernel(x_ref, t_ref, s_ref, w_hbm, out_ref, w_vmem, w_sem):
        # Kick off the (largest) weight-slab DMA immediately; it overlaps with
        # the serial KL / softmax chain below which only needs x, t, logp.
        wcopy = pltpu.make_async_copy(w_hbm, w_vmem, w_sem)
        wcopy.start()

        x = x_ref[...]                           # [B, C] student logits (f32)
        t = t_ref[...]                           # [B, C] teacher logits (f32)
        small_v = s_ref[...]                     # [8, width] biases + logp (f32)
        logp = small_v[4:5, 0:C]                 # [1, C] class log-prior

        # ---- KL losses (shared p_t * log_pt term) ----
        log_ps = _log_softmax(x)
        log_pt = _log_softmax(t)
        p_t = jnp.exp(log_pt)
        ent = jnp.mean(p_t * log_pt, axis=-1, keepdims=True)                 # [B, 1]
        loss_mean = ent - jnp.mean(p_t * log_ps, axis=-1, keepdims=True)     # [B, 1]
        bal_mean = ent - jnp.mean(p_t * _log_softmax(x + logp),
                                  axis=-1, keepdims=True)                    # [B, 1]

        # Weights needed from here on.
        wcopy.wait()

        def wmat(name, rows, cols):
            return w_vmem[off[name]:off[name] + rows, 0:cols].astype(jnp.float32)

        # ---- loss balancer MLP: (Linear -> BN -> ReLU) x3 -> Linear ----
        # Layer 1 split into student/teacher halves (no concatenated input).
        h = (jnp.dot(x, wmat("w1a", C, HIDDEN[0]), preferred_element_type=jnp.float32)
             + jnp.dot(t, wmat("w1b", C, HIDDEN[0]), preferred_element_type=jnp.float32)
             + small_v[0:1, 0:HIDDEN[0]])
        h = _bn_relu(h)                                                      # [B, 200]

        h = jnp.dot(h, wmat("w2", HIDDEN[0], HIDDEN[1]),
                    preferred_element_type=jnp.float32) + small_v[1:2, 0:HIDDEN[1]]
        h = _bn_relu(h)                                                      # [B, 100]

        h = jnp.dot(h, wmat("w3", HIDDEN[1], HIDDEN[2]),
                    preferred_element_type=jnp.float32) + small_v[2:3, 0:HIDDEN[2]]
        h = _bn_relu(h)                                                      # [B, 50]

        out = jnp.dot(h, wmat("w4", HIDDEN[2], HIDDEN[3]),
                      preferred_element_type=jnp.float32) + small_v[3:4, 0:HIDDEN[3]]

        # softmax over 2 classes == exact sigmoid of the logit difference.
        d = out[:, 0:1] - out[:, 1:2]                                        # [B, 1]
        f0 = 1.0 / (1.0 + jnp.exp(-d))
        f1 = 1.0 - f0

        # total_loss = (stack([loss.mean(1), balanced.mean(1)], 1) * factors).sum(1).mean()
        per_sample = loss_mean * f0 + bal_mean * f1                          # [B, 1]
        out_ref[...] = jnp.mean(per_sample, axis=0, keepdims=True)           # [1, 1]

    # Advisory cost estimate so XLA can overlap surrounding HLOs around this
    # us-scale custom call.
    B = batch_hint
    flops = 2 * B * (2 * C * HIDDEN[0] + HIDDEN[0] * HIDDEN[1]
                     + HIDDEN[1] * HIDDEN[2] + HIDDEN[2] * HIDDEN[3])
    transcendentals = B * (4 * C + 8)
    bytes_accessed = int(wslab.size) * 2 + int(small.size) * 4 + 2 * B * C * 4 + 4

    call = pl.pallas_call(
        kernel,
        out_shape=jax.ShapeDtypeStruct((1, 1), jnp.float32),
        in_specs=[pl.BlockSpec(memory_space=pltpu.MemorySpace.VMEM),   # x
                  pl.BlockSpec(memory_space=pltpu.MemorySpace.VMEM),   # t
                  pl.BlockSpec(memory_space=pltpu.MemorySpace.VMEM),   # biases/logp
                  pl.BlockSpec(memory_space=pl.ANY)],                  # bf16 weight slab (HBM)
        out_specs=pl.BlockSpec(memory_space=pltpu.MemorySpace.VMEM),
        scratch_shapes=[pltpu.VMEM((n_rows, width), jnp.bfloat16),
                        pltpu.SemaphoreType.DMA(())],
        cost_estimate=pl.CostEstimate(flops=flops,
                                      transcendentals=transcendentals,
                                      bytes_accessed=bytes_accessed),
    )

    @jax.jit
    def forward(logits, teacher_logits):
        return call(logits.astype(jnp.float32),
                    teacher_logits.astype(jnp.float32),
                    small, wslab)[0, 0]

    return forward


# --------------------------- init / reference / main -------------------------

def init_params(num_classes, key):
    """Deterministic synthetic init for the loss_balancer MLP (PyTorch-style)."""
    dims = [(num_classes * 2, HIDDEN[0]), (HIDDEN[0], HIDDEN[1]),
            (HIDDEN[1], HIDDEN[2]), (HIDDEN[2], HIDDEN[3])]
    params = {}
    for i, (fan_in, fan_out) in enumerate(dims, start=1):
        key, kw, kb = jax.random.split(key, 3)
        bound = 1.0 / jnp.sqrt(fan_in)
        # stored as [in, out] (transpose of PyTorch's [out, in])
        params[f"w{i}"] = jax.random.uniform(kw, (fan_in, fan_out), jnp.float32, -bound, bound)
        params[f"b{i}"] = jax.random.uniform(kb, (1, fan_out), jnp.float32, -bound, bound)
    return params


def reference_forward(logits, teacher_logits, cls_num_list, params, quantize_weights=False):
    """Pure-JAX reference (same math as the PyTorch module).  With
    quantize_weights=True the MLP weights are rounded to bf16 like the kernel's
    packed slab (biases stay f32), giving a tight apples-to-apples check."""
    x = logits.astype(jnp.float32)
    t = teacher_logits.astype(jnp.float32)
    log_prior = jnp.log(cls_num_list / jnp.sum(cls_num_list))[None, :]

    log_ps, log_pt = _log_softmax(x), _log_softmax(t)
    p_t = jnp.exp(log_pt)
    loss = p_t * (log_pt - log_ps)
    balanced = p_t * (log_pt - _log_softmax(x + log_prior))

    def q(w):
        return w.astype(jnp.bfloat16).astype(jnp.float32) if quantize_weights else w

    inp = jnp.concatenate([x, t], axis=1)
    h = _bn_relu(inp @ q(params["w1"]) + params["b1"])
    h = _bn_relu(h @ q(params["w2"]) + params["b2"])
    h = _bn_relu(h @ q(params["w3"]) + params["b3"])
    out = h @ q(params["w4"]) + params["b4"]
    m = jnp.max(out, axis=-1, keepdims=True)
    e = jnp.exp(out - m)
    factors = e / jnp.sum(e, axis=-1, keepdims=True)
    total = jnp.stack([loss.mean(1), balanced.mean(1)], axis=1) * factors
    return total.sum(1).mean()


if __name__ == "__main__":
    B, C = 8, 10
    key = jax.random.PRNGKey(0)
    k_log, k_tea, k_par = jax.random.split(key, 3)

    logits = jax.random.normal(k_log, (B, C), jnp.float32)
    teacher_logits = jax.random.normal(k_tea, (B, C), jnp.float32)
    # long-tailed class counts (deterministic)
    cls_num_list = jnp.asarray([1000.0 * (0.7 ** i) for i in range(C)], dtype=jnp.float32)

    params = init_params(C, k_par)
    forward = make_micro_attention_factor_ver2(C, cls_num_list, params, batch_hint=B)

    result = jax.block_until_ready(forward(logits, teacher_logits))

    # Tight check against a reference using the same bf16-rounded weights
    # (isolates kernel math from the intentional weight quantization), plus a
    # looser sanity check against the full-f32 reference.
    ref_q = reference_forward(logits, teacher_logits, cls_num_list, params,
                              quantize_weights=True)
    ref_f = reference_forward(logits, teacher_logits, cls_num_list, params,
                              quantize_weights=False)

    assert jnp.isfinite(result), "kernel produced non-finite result"
    assert jnp.allclose(result, ref_q, rtol=5e-3, atol=1e-5), (result, ref_q)
    assert jnp.allclose(result, ref_f, rtol=5e-2, atol=5e-3), (result, ref_f)

    print("KERNEL_OK")
</pallas_src>

<mosaic_0001>
module attributes {stable_mosaic.version = 11 : i64} {
  func.func @kernel(%arg0: memref<8x10xf32, #tpu.memory_space<vmem>>, %arg1: memref<8x10xf32, #tpu.memory_space<vmem>>, %arg2: memref<8x200xf32, #tpu.memory_space<vmem>>, %arg3: memref<416x200xbf16, #tpu.memory_space<any>>, %arg4: memref<1x1xf32, #tpu.memory_space<vmem>>, %arg5: memref<416x200xbf16, #tpu.memory_space<vmem>>, %arg6: memref<!tpu.dma_semaphore, #tpu.memory_space<semaphore_mem>>) attributes {dimension_semantics = [], scalar_prefetch = 0 : i64, scratch_operands = 2 : i64, tpu.core_type = #tpu.core_type<tc>} {
    tpu.enqueue_dma source(%arg3 : memref<416x200xbf16, #tpu.memory_space<any>>) target(%arg5 : memref<416x200xbf16, #tpu.memory_space<vmem>>) target_semaphore(%arg6 : memref<!tpu.dma_semaphore, #tpu.memory_space<semaphore_mem>>)
    %c0 = arith.constant 0 : index
    %c0_0 = arith.constant 0 : index
    %0 = vector.load %arg0[%c0, %c0_0] : memref<8x10xf32, #tpu.memory_space<vmem>>, vector<8x10xf32>
    %c0_1 = arith.constant 0 : index
    %c0_2 = arith.constant 0 : index
    %1 = vector.load %arg1[%c0_1, %c0_2] : memref<8x10xf32, #tpu.memory_space<vmem>>, vector<8x10xf32>
    %c0_3 = arith.constant 0 : index
    %c0_4 = arith.constant 0 : index
    %2 = vector.load %arg2[%c0_3, %c0_4] : memref<8x200xf32, #tpu.memory_space<vmem>>, vector<8x200xf32>
    %3 = vector.extract_strided_slice %2 {offsets = [4, 0], sizes = [1, 10], strides = [1, 1]} : vector<8x200xf32> to vector<1x10xf32>
    %cst = arith.constant dense<0xFF800000> : vector<8xf32>
    %4 = vector.multi_reduction <maximumf>, %0, %cst [1] : vector<8x10xf32> to vector<8xf32>
    %5 = vector.shape_cast %4 : vector<8xf32> to vector<8x1xf32>
    %6 = vector.broadcast %5 : vector<8x1xf32> to vector<8x10xf32>
    %7 = arith.subf %0, %6 : vector<8x10xf32>
    %8 = math.exp %7 : vector<8x10xf32>
    %cst_5 = arith.constant dense<0.000000e+00> : vector<8xf32>
    %9 = vector.multi_reduction <add>, %8, %cst_5 [1] : vector<8x10xf32> to vector<8xf32>
    %10 = vector.shape_cast %9 : vector<8xf32> to vector<8x1xf32>
    %11 = math.log %10 : vector<8x1xf32>
    %12 = vector.broadcast %11 : vector<8x1xf32> to vector<8x10xf32>
    %13 = arith.subf %7, %12 : vector<8x10xf32>
    %cst_6 = arith.constant dense<0xFF800000> : vector<8xf32>
    %14 = vector.multi_reduction <maximumf>, %1, %cst_6 [1] : vector<8x10xf32> to vector<8xf32>
    %15 = vector.shape_cast %14 : vector<8xf32> to vector<8x1xf32>
    %16 = vector.broadcast %15 : vector<8x1xf32> to vector<8x10xf32>
    %17 = arith.subf %1, %16 : vector<8x10xf32>
    %18 = math.exp %17 : vector<8x10xf32>
    %cst_7 = arith.constant dense<0.000000e+00> : vector<8xf32>
    %19 = vector.multi_reduction <add>, %18, %cst_7 [1] : vector<8x10xf32> to vector<8xf32>
    %20 = vector.shape_cast %19 : vector<8xf32> to vector<8x1xf32>
    %21 = math.log %20 : vector<8x1xf32>
    %22 = vector.broadcast %21 : vector<8x1xf32> to vector<8x10xf32>
    %23 = arith.subf %17, %22 : vector<8x10xf32>
    %24 = math.exp %23 : vector<8x10xf32>
    %25 = arith.mulf %24, %23 : vector<8x10xf32>
    %cst_8 = arith.constant dense<0.000000e+00> : vector<8xf32>
    %26 = vector.multi_reduction <add>, %25, %cst_8 [1] : vector<8x10xf32> to vector<8xf32>
    %27 = vector.shape_cast %26 : vector<8xf32> to vector<8x1xf32>
    %cst_9 = arith.constant 1.000000e+01 : f32
    %28 = vector.broadcast %cst_9 : f32 to vector<8x1xf32>
    %29 = arith.divf %27, %28 : vector<8x1xf32>
    %30 = arith.mulf %24, %13 : vector<8x10xf32>
    %cst_10 = arith.constant dense<0.000000e+00> : vector<8xf32>
    %31 = vector.multi_reduction <add>, %30, %cst_10 [1] : vector<8x10xf32> to vector<8xf32>
    %32 = vector.shape_cast %31 : vector<8xf32> to vector<8x1xf32>
    %cst_11 = arith.constant 1.000000e+01 : f32
    %33 = vector.broadcast %cst_11 : f32 to vector<8x1xf32>
    %34 = arith.divf %32, %33 : vector<8x1xf32>
    %35 = arith.subf %29, %34 : vector<8x1xf32>
    %36 = vector.broadcast %3 : vector<1x10xf32> to vector<8x10xf32>
    %37 = arith.addf %0, %36 : vector<8x10xf32>
    %cst_12 = arith.constant dense<0xFF800000> : vector<8xf32>
    %38 = vector.multi_reduction <maximumf>, %37, %cst_12 [1] : vector<8x10xf32> to vector<8xf32>
    %39 = vector.shape_cast %38 : vector<8xf32> to vector<8x1xf32>
    %40 = vector.broadcast %39 : vector<8x1xf32> to vector<8x10xf32>
    %41 = arith.subf %37, %40 : vector<8x10xf32>
    %42 = math.exp %41 : vector<8x10xf32>
    %cst_13 = arith.constant dense<0.000000e+00> : vector<8xf32>
    %43 = vector.multi_reduction <add>, %42, %cst_13 [1] : vector<8x10xf32> to vector<8xf32>
    %44 = vector.shape_cast %43 : vector<8xf32> to vector<8x1xf32>
    %45 = math.log %44 : vector<8x1xf32>
    %46 = vector.broadcast %45 : vector<8x1xf32> to vector<8x10xf32>
    %47 = arith.subf %41, %46 : vector<8x10xf32>
    %48 = arith.mulf %24, %47 : vector<8x10xf32>
    %cst_14 = arith.constant dense<0.000000e+00> : vector<8xf32>
    %49 = vector.multi_reduction <add>, %48, %cst_14 [1] : vector<8x10xf32> to vector<8xf32>
    %50 = vector.shape_cast %49 : vector<8xf32> to vector<8x1xf32>
    %cst_15 = arith.constant 1.000000e+01 : f32
    %51 = vector.broadcast %cst_15 : f32 to vector<8x1xf32>
    %52 = arith.divf %50, %51 : vector<8x1xf32>
    %53 = arith.subf %29, %52 : vector<8x1xf32>
    tpu.wait_dma2 semaphore(%arg6 : memref<!tpu.dma_semaphore, #tpu.memory_space<semaphore_mem>>) src(%arg3 : memref<416x200xbf16, #tpu.memory_space<any>>) dst(%arg5 : memref<416x200xbf16, #tpu.memory_space<vmem>>)
    %c0_16 = arith.constant 0 : index
    %c0_17 = arith.constant 0 : index
    %54 = vector.load %arg5[%c0_16, %c0_17] : memref<416x200xbf16, #tpu.memory_space<vmem>>, vector<10x200xbf16>
    %55 = arith.extf %54 : vector<10x200xbf16> to vector<10x200xf32>
    %cst_18 = arith.constant dense<0.000000e+00> : vector<8x200xf32>
    %56 = tpu.matmul %0, %55, %cst_18 {dimension_numbers = #tpu.dot_dimension_numbers<[1], [0], [0], [1], [0, 0, 1, 1], [], []>} : vector<8x10xf32>, vector<10x200xf32>, vector<8x200xf32> -> vector<8x200xf32>
    %c16 = arith.constant 16 : index
    %c0_19 = arith.constant 0 : index
    %57 = vector.load %arg5[%c16, %c0_19] : memref<416x200xbf16, #tpu.memory_space<vmem>>, vector<10x200xbf16>
    %58 = arith.extf %57 : vector<10x200xbf16> to vector<10x200xf32>
    %cst_20 = arith.constant dense<0.000000e+00> : vector<8x200xf32>
    %59 = tpu.matmul %1, %58, %cst_20 {dimension_numbers = #tpu.dot_dimension_numbers<[1], [0], [0], [1], [0, 0, 1, 1], [], []>} : vector<8x10xf32>, vector<10x200xf32>, vector<8x200xf32> -> vector<8x200xf32>
    %60 = arith.addf %56, %59 : vector<8x200xf32>
    %61 = vector.extract_strided_slice %2 {offsets = [0, 0], sizes = [1, 200], strides = [1, 1]} : vector<8x200xf32> to vector<1x200xf32>
    %62 = vector.broadcast %61 : vector<1x200xf32> to vector<8x200xf32>
    %63 = arith.addf %60, %62 : vector<8x200xf32>
    %cst_21 = arith.constant dense<0.000000e+00> : vector<200xf32>
    %64 = vector.multi_reduction <add>, %63, %cst_21 [0] : vector<8x200xf32> to vector<200xf32>
    %65 = vector.shape_cast %64 : vector<200xf32> to vector<1x200xf32>
    %cst_22 = arith.constant 8.000000e+00 : f32
    %66 = vector.broadcast %cst_22 : f32 to vector<1x200xf32>
    %67 = arith.divf %65, %66 : vector<1x200xf32>
    %68 = vector.broadcast %67 : vector<1x200xf32> to vector<8x200xf32>
    %69 = arith.subf %63, %68 : vector<8x200xf32>
    %70 = arith.mulf %69, %69 : vector<8x200xf32>
    %cst_23 = arith.constant dense<0.000000e+00> : vector<200xf32>
    %71 = vector.multi_reduction <add>, %70, %cst_23 [0] : vector<8x200xf32> to vector<200xf32>
    %72 = vector.shape_cast %71 : vector<200xf32> to vector<1x200xf32>
    %cst_24 = arith.constant 8.000000e+00 : f32
    %73 = vector.broadcast %cst_24 : f32 to vector<1x200xf32>
    %74 = arith.divf %72, %73 : vector<1x200xf32>
    %cst_25 = arith.constant 9.99999974E-6 : f32
    %75 = vector.broadcast %cst_25 : f32 to vector<1x200xf32>
    %76 = arith.addf %74, %75 : vector<1x200xf32>
    %77 = math.rsqrt %76 : vector<1x200xf32>
    %78 = vector.broadcast %77 : vector<1x200xf32> to vector<8x200xf32>
    %79 = arith.mulf %69, %78 : vector<8x200xf32>
    %cst_26 = arith.constant 0.000000e+00 : f32
    %80 = vector.broadcast %cst_26 : f32 to vector<8x200xf32>
    %81 = arith.maximumf %79, %80 : vector<8x200xf32>
    %c32 = arith.constant 32 : index
    %c0_27 = arith.constant 0 : index
    %82 = vector.load %arg5[%c32, %c0_27] : memref<416x200xbf16, #tpu.memory_space<vmem>>, vector<200x100xbf16>
    %83 = arith.extf %82 : vector<200x100xbf16> to vector<200x100xf32>
    %cst_28 = arith.constant dense<0.000000e+00> : vector<8x100xf32>
    %84 = tpu.matmul %81, %83, %cst_28 {dimension_numbers = #tpu.dot_dimension_numbers<[1], [0], [0], [1], [0, 0, 1, 1], [], []>} : vector<8x200xf32>, vector<200x100xf32>, vector<8x100xf32> -> vector<8x100xf32>
    %85 = vector.extract_strided_slice %2 {offsets = [1, 0], sizes = [1, 100], strides = [1, 1]} : vector<8x200xf32> to vector<1x100xf32>
    %86 = vector.broadcast %85 : vector<1x100xf32> to vector<8x100xf32>
    %87 = arith.addf %84, %86 : vector<8x100xf32>
    %cst_29 = arith.constant dense<0.000000e+00> : vector<100xf32>
    %88 = vector.multi_reduction <add>, %87, %cst_29 [0] : vector<8x100xf32> to vector<100xf32>
    %89 = vector.shape_cast %88 : vector<100xf32> to vector<1x100xf32>
    %cst_30 = arith.constant 8.000000e+00 : f32
    %90 = vector.broadcast %cst_30 : f32 to vector<1x100xf32>
    %91 = arith.divf %89, %90 : vector<1x100xf32>
    %92 = vector.broadcast %91 : vector<1x100xf32> to vector<8x100xf32>
    %93 = arith.subf %87, %92 : vector<8x100xf32>
    %94 = arith.mulf %93, %93 : vector<8x100xf32>
    %cst_31 = arith.constant dense<0.000000e+00> : vector<100xf32>
    %95 = vector.multi_reduction <add>, %94, %cst_31 [0] : vector<8x100xf32> to vector<100xf32>
    %96 = vector.shape_cast %95 : vector<100xf32> to vector<1x100xf32>
    %cst_32 = arith.constant 8.000000e+00 : f32
    %97 = vector.broadcast %cst_32 : f32 to vector<1x100xf32>
    %98 = arith.divf %96, %97 : vector<1x100xf32>
    %cst_33 = arith.constant 9.99999974E-6 : f32
    %99 = vector.broadcast %cst_33 : f32 to vector<1x100xf32>
    %100 = arith.addf %98, %99 : vector<1x100xf32>
    %101 = math.rsqrt %100 : vector<1x100xf32>
    %102 = vector.broadcast %101 : vector<1x100xf32> to vector<8x100xf32>
    %103 = arith.mulf %93, %102 : vector<8x100xf32>
    %cst_34 = arith.constant 0.000000e+00 : f32
    %104 = vector.broadcast %cst_34 : f32 to vector<8x100xf32>
    %105 = arith.maximumf %103, %104 : vector<8x100xf32>
    %c240 = arith.constant 240 : index
    %c0_35 = arith.constant 0 : index
    %106 = vector.load %arg5[%c240, %c0_35] : memref<416x200xbf16, #tpu.memory_space<vmem>>, vector<100x50xbf16>
    %107 = arith.extf %106 : vector<100x50xbf16> to vector<100x50xf32>
    %cst_36 = arith.constant dense<0.000000e+00> : vector<8x50xf32>
    %108 = tpu.matmul %105, %107, %cst_36 {dimension_numbers = #tpu.dot_dimension_numbers<[1], [0], [0], [1], [0, 0, 1, 1], [], []>} : vector<8x100xf32>, vector<100x50xf32>, vector<8x50xf32> -> vector<8x50xf32>
    %109 = vector.extract_strided_slice %2 {offsets = [2, 0], sizes = [1, 50], strides = [1, 1]} : vector<8x200xf32> to vector<1x50xf32>
    %110 = vector.broadcast %109 : vector<1x50xf32> to vector<8x50xf32>
    %111 = arith.addf %108, %110 : vector<8x50xf32>
    %cst_37 = arith.constant dense<0.000000e+00> : vector<50xf32>
    %112 = vector.multi_reduction <add>, %111, %cst_37 [0] : vector<8x50xf32> to vector<50xf32>
    %113 = vector.shape_cast %112 : vector<50xf32> to vector<1x50xf32>
    %cst_38 = arith.constant 8.000000e+00 : f32
    %114 = vector.broadcast %cst_38 : f32 to vector<1x50xf32>
    %115 = arith.divf %113, %114 : vector<1x50xf32>
    %116 = vector.broadcast %115 : vector<1x50xf32> to vector<8x50xf32>
    %117 = arith.subf %111, %116 : vector<8x50xf32>
    %118 = arith.mulf %117, %117 : vector<8x50xf32>
    %cst_39 = arith.constant dense<0.000000e+00> : vector<50xf32>
    %119 = vector.multi_reduction <add>, %118, %cst_39 [0] : vector<8x50xf32> to vector<50xf32>
    %120 = vector.shape_cast %119 : vector<50xf32> to vector<1x50xf32>
    %cst_40 = arith.constant 8.000000e+00 : f32
    %121 = vector.broadcast %cst_40 : f32 to vector<1x50xf32>
    %122 = arith.divf %120, %121 : vector<1x50xf32>
    %cst_41 = arith.constant 9.99999974E-6 : f32
    %123 = vector.broadcast %cst_41 : f32 to vector<1x50xf32>
    %124 = arith.addf %122, %123 : vector<1x50xf32>
    %125 = math.rsqrt %124 : vector<1x50xf32>
    %126 = vector.broadcast %125 : vector<1x50xf32> to vector<8x50xf32>
    %127 = arith.mulf %117, %126 : vector<8x50xf32>
    %cst_42 = arith.constant 0.000000e+00 : f32
    %128 = vector.broadcast %cst_42 : f32 to vector<8x50xf32>
    %129 = arith.maximumf %127, %128 : vector<8x50xf32>
    %c352 = arith.constant 352 : index
    %c0_43 = arith.constant 0 : index
    %130 = vector.load %arg5[%c352, %c0_43] : memref<416x200xbf16, #tpu.memory_space<vmem>>, vector<50x2xbf16>
    %131 = arith.extf %130 : vector<50x2xbf16> to vector<50x2xf32>
    %cst_44 = arith.constant dense<0.000000e+00> : vector<8x2xf32>
    %132 = tpu.matmul %129, %131, %cst_44 {dimension_numbers = #tpu.dot_dimension_numbers<[1], [0], [0], [1], [0, 0, 1, 1], [], []>} : vector<8x50xf32>, vector<50x2xf32>, vector<8x2xf32> -> vector<8x2xf32>
    %133 = vector.extract_strided_slice %2 {offsets = [3, 0], sizes = [1, 2], strides = [1, 1]} : vector<8x200xf32> to vector<1x2xf32>
    %134 = vector.broadcast %133 : vector<1x2xf32> to vector<8x2xf32>
    %135 = arith.addf %132, %134 : vector<8x2xf32>
    %136 = vector.extract_strided_slice %135 {offsets = [0, 0], sizes = [8, 1], strides = [1, 1]} : vector<8x2xf32> to vector<8x1xf32>
    %137 = vector.extract_strided_slice %135 {offsets = [0, 1], sizes = [8, 1], strides = [1, 1]} : vector<8x2xf32> to vector<8x1xf32>
    %138 = arith.subf %136, %137 : vector<8x1xf32>
    %cst_45 = arith.constant 0.000000e+00 : f32
    %139 = vector.broadcast %cst_45 : f32 to vector<8x1xf32>
    %140 = arith.subf %139, %138 : vector<8x1xf32>
    %141 = math.exp %140 : vector<8x1xf32>
    %cst_46 = arith.constant 1.000000e+00 : f32
    %142 = vector.broadcast %cst_46 : f32 to vector<8x1xf32>
    %143 = arith.addf %142, %141 : vector<8x1xf32>
    %cst_47 = arith.constant 1.000000e+00 : f32
    %144 = vector.broadcast %cst_47 : f32 to vector<8x1xf32>
    %145 = arith.divf %144, %143 : vector<8x1xf32>
    %cst_48 = arith.constant 1.000000e+00 : f32
    %146 = vector.broadcast %cst_48 : f32 to vector<8x1xf32>
    %147 = arith.subf %146, %145 : vector<8x1xf32>
    %148 = arith.mulf %35, %145 : vector<8x1xf32>
    %149 = arith.mulf %53, %147 : vector<8x1xf32>
    %150 = arith.addf %148, %149 : vector<8x1xf32>
    %cst_49 = arith.constant dense<0.000000e+00> : vector<1xf32>
    %151 = vector.multi_reduction <add>, %150, %cst_49 [0] : vector<8x1xf32> to vector<1xf32>
    %152 = vector.shape_cast %151 : vector<1xf32> to vector<1x1xf32>
    %cst_50 = arith.constant 8.000000e+00 : f32
    %153 = vector.broadcast %cst_50 : f32 to vector<1x1xf32>
    %154 = arith.divf %152, %153 : vector<1x1xf32>
    %c0_51 = arith.constant 0 : index
    %c0_52 = arith.constant 0 : index
    %155 = vector.load %arg4[%c0_51, %c0_52] : memref<1x1xf32, #tpu.memory_space<vmem>>, vector<1x1xf32>
    tpu.vector_store %arg4[%c0_51, %c0_52], %154 {strides = array<i32>} : memref<1x1xf32, #tpu.memory_space<vmem>>, vector<1x1xf32>,
    return
  }
}

</mosaic_0001>

<llo_original>
// kernel: forward.1
$region0: #{forward.1}
  #allocation0 [shape = 'u32[]', space=smem, size = 0x4, offset = 0x4, fixed_abs, tag = 'smem constant byte address 0x4 - core index']
  #allocation1 [shape = 'u32[144,128]{1,0:T(1,128)}', space=vmem, size = 0x12000, scoped, tag = 'internal scratch']
  #allocation2 [shape = 'bf16[416,200]{1,0:T(16,128)(2,1)}', space=vmem, size = 0x34000, scoped, tag = 'scratch operand']
  #allocation3 [shape = 's32[1]{0}', space=sflag, size = 0x4, scoped, tag = 'scratch operand']
  #allocation6 [shape = 's32[]', space=sflag, size = 0x4, offset = 0, fixed_abs, tag = 'sflag constant byte address 0x0 - dummy sync flag']
  %s0 = inlined_call_operand.vmem [shape: f32[8,10], index: 0, kind: input, shape index: {}]
  %s1 = inlined_call_operand.vmem [shape: f32[8,10], index: 1, kind: input, shape index: {}]
  %s2 = inlined_call_operand.vmem [shape: f32[8,200], index: 2, kind: input, shape index: {}]
  %s3 = inlined_call_operand.vmem [shape: bf16[416,200], index: 3, kind: input, shape index: {}]
  %s4 = inlined_call_operand.hbm [shape: f32[1,1], index: 4, kind: output, shape index: {}]
  %s5 = sld [smem:[#allocation0]]
  $region59: #{forward.1} parent=0
    _
  %s7 = ssub.s32 1, %s5
  %s8 = scalar_select 0, %s7, %s5
  $region1: #{forward.1} parent=0
    #allocation4 [shape = 'u8[512]{0}', space=vmem, size = 0x400, scoped, tag = 'output window, operand 0, single buffered']
    #allocation5 [shape = 's32[1]{0}', space=sflag, size = 0x4, scoped, tag = 'scoped memory for forward.1']
    %9 = vsyncpa [#allocation5], 0
    // Predicated region
    $region2: #{forward.1} parent=1 // pred_check
      _
    $region3: #{forward.1} parent=1 // pred_check_branch
      %11 = sbr.rel (0) target = $region5
    $region4: #{forward.1} parent=1 // pred_region
      _
    $region5: #{forward.1} parent=1 // pred_fallthru
      _
    // Predicated region
    $region6: #{forward.1} parent=1 // pred_check
      _
    $region7: #{forward.1} parent=1 // pred_check_branch
      %13 = sbr.rel (0) target = $region9
    $region8: #{forward.1} parent=1 // pred_region
      _
    $region9: #{forward.1} parent=1 // pred_fallthru
      _
    // Predicated region
    $region10: #{forward.1} parent=1 // pred_check
      _
    $region11: #{forward.1} parent=1 // pred_check_branch
      %15 = sbr.rel (0) target = $region13
    $region12: #{forward.1} parent=1 // pred_region
      _
    $region13: #{forward.1} parent=1 // pred_fallthru
      _
    %p17 = scmp.lt.u32.totalorder 4, 8
    %p18 = pneg %p17
    // Predicated region
    $region14: #{forward.1} parent=1 // pred_check
      _
    $region15: #{forward.1} parent=1 // pred_check_branch
      %20 = sbr.rel (%p17) target = $region17
    $region16: #{forward.1} parent=1 // pred_region
      %s241 = sand.u32 4, 7
      %p242 = scmp.eq.s32.totalorder %s241, 0
      %p243 = pneg %p242
      // Predicated region
      $region29: #{forward.1} parent=16 // pred_check
        _
      $region30: #{forward.1} parent=16 // pred_check_branch
        %245 = sbr.rel (%p242) target = $region32
      $region31: #{forward.1} parent=16 // pred_region
        %s246 = sand.u32 4, 7
        %s247 = ssub.s32 4, %s246
        %s248 = scalar_lea.vmem %s3, %s247
        %s249 = ssub.s32 4, %s246
        %s250 = scalar_lea.vmem [#allocation2], %s249
        loop: start=0, step=1, limit=1
        $region33: #{forward.1} parent=31 // loop_pre_header
          _
        $region34: #{forward.1} parent=31 // loop_header
          %s252 = sphi 0, %s256
          %p253 = scmp.ge.s32.totalorder %s252, 1
          %s257 = sphi %s3, %s3
          %s258 = sphi [#allocation2], [#allocation2]
        $region35: #{forward.1} parent=31 // loop_header_branch
          %255 = sbr.rel (%p253) target = $region39
        $region36: #{forward.1} parent=31 // loop_body
          _
        $region37: #{forward.1} parent=31 // loop_footer
          %s256 = sadd.s32 1, %s252
        $region38: #{forward.1} parent=31 // loop_footer_branch
          %251 = sbr.rel target = $region34
        $region39: #{forward.1} parent=31 // loop_exit
          _
        %s259 = sshllo.u32 0, %s246
        loop: start=0, step=1, limit=1
        $region40: #{forward.1} parent=31 // loop_pre_header
          _
        $region41: #{forward.1} parent=31 // loop_header
          %s261 = sphi 0, %s265
          %p262 = scmp.ge.s32.totalorder %s261, 1
          %s266 = sphi %s248, %s248
          %s267 = sphi %s250, %s250
        $region42: #{forward.1} parent=31 // loop_header_branch
          %264 = sbr.rel (%p262) target = $region46
        $region43: #{forward.1} parent=31 // loop_body
          %v268 = vld [vmem:[%s266] sm:%s259]
          %269 = vst [vmem:[%s267] sm:%s259] %v268
          %v270 = vld [vmem:[%s266 + $0x8] sm:%s259]
          %271 = vst [vmem:[%s267 + $0x4] sm:%s259] %v270
          %v272 = vld [vmem:[%s266 + $0x4] sm:%s259]
          %273 = vst [vmem:[%s267 + $0x8] sm:%s259] %v272
          %v274 = vld [vmem:[%s266 + $0xc] sm:%s259]
          %275 = vst [vmem:[%s267 + $0xc] sm:%s259] %v274
          %v276 = vld [vmem:[%s266 + $0x10] sm:%s259]
          %277 = vst [vmem:[%s267 + $0x10] sm:%s259] %v276
          %v278 = vld [vmem:[%s266 + $0x18] sm:%s259]
          %279 = vst [vmem:[%s267 + $0x14] sm:%s259] %v278
          %v280 = vld [vmem:[%s266 + $0x14] sm:%s259]
          %281 = vst [vmem:[%s267 + $0x18] sm:%s259] %v280
          %v282 = vld [vmem:[%s266 + $0x1c] sm:%s259]
          %283 = vst [vmem:[%s267 + $0x1c] sm:%s259] %v282
          %v284 = vld [vmem:[%s266 + $0x20] sm:%s259]
          %285 = vst [vmem:[%s267 + $0x20] sm:%s259] %v284
          %v286 = vld [vmem:[%s266 + $0x28] sm:%s259]
          %287 = vst [vmem:[%s267 + $0x24] sm:%s259] %v286
          %v288 = vld [vmem:[%s266 + $0x24] sm:%s259]
          %289 = vst [vmem:[%s267 + $0x28] sm:%s259] %v288
          %v290 = vld [vmem:[%s266 + $0x2c] sm:%s259]
          %291 = vst [vmem:[%s267 + $0x2c] sm:%s259] %v290
          %v292 = vld [vmem:[%s266 + $0x30] sm:%s259]
          %293 = vst [vmem:[%s267 + $0x30] sm:%s259] %v292
          %v294 = vld [vmem:[%s266 + $0x38] sm:%s259]
          %295 = vst [vmem:[%s267 + $0x34] sm:%s259] %v294
          %v296 = vld [vmem:[%s266 + $0x34] sm:%s259]
          %297 = vst [vmem:[%s267 + $0x38] sm:%s259] %v296
          %v298 = vld [vmem:[%s266 + $0x3c] sm:%s259]
          %299 = vst [vmem:[%s267 + $0x3c] sm:%s259] %v298
          %v300 = vld [vmem:[%s266 + $0x40] sm:%s259]
          %301 = vst [vmem:[%s267 + $0x40] sm:%s259] %v300
          %v302 = vld [vmem:[%s266 + $0x48] sm:%s259]
          %303 = vst [vmem:[%s267 + $0x44] sm:%s259] %v302
          %v304 = vld [vmem:[%s266 + $0x44] sm:%s259]
          %305 = vst [vmem:[%s267 + $0x48] sm:%s259] %v304
          %v306 = vld [vmem:[%s266 + $0x4c] sm:%s259]
          %307 = vst [vmem:[%s267 + $0x4c] sm:%s259] %v306
          %v308 = vld [vmem:[%s266 + $0x50] sm:%s259]
          %309 = vst [vmem:[%s267 + $0x50] sm:%s259] %v308
          %v310 = vld [vmem:[%s266 + $0x58] sm:%s259]
          %311 = vst [vmem:[%s267 + $0x54] sm:%s259] %v310
          %v312 = vld [vmem:[%s266 + $0x54] sm:%s259]
          %313 = vst [vmem:[%s267 + $0x58] sm:%s259] %v312
          %v314 = vld [vmem:[%s266 + $0x5c] sm:%s259]
          %315 = vst [vmem:[%s267 + $0x5c] sm:%s259] %v314
          %v316 = vld [vmem:[%s266 + $0x60] sm:%s259]
          %317 = vst [vmem:[%s267 + $0x60] sm:%s259] %v316
          %v318 = vld [vmem:[%s266 + $0x68] sm:%s259]
          %319 = vst [vmem:[%s267 + $0x64] sm:%s259] %v318
          %v320 = vld [vmem:[%s266 + $0x64] sm:%s259]
          %321 = vst [vmem:[%s267 + $0x68] sm:%s259] %v320
          %v322 = vld [vmem:[%s266 + $0x6c] sm:%s259]
          %323 = vst [vmem:[%s267 + $0x6c] sm:%s259] %v322
          %v324 = vld [vmem:[%s266 + $0x70] sm:%s259]
          %325 = vst [vmem:[%s267 + $0x70] sm:%s259] %v324
          %v326 = vld [vmem:[%s266 + $0x78] sm:%s259]
          %327 = vst [vmem:[%s267 + $0x74] sm:%s259] %v326
          %v328 = vld [vmem:[%s266 + $0x74] sm:%s259]
          %329 = vst [vmem:[%s267 + $0x78] sm:%s259] %v328
          %v330 = vld [vmem:[%s266 + $0x7c] sm:%s259]
          %331 = vst [vmem:[%s267 + $0x7c] sm:%s259] %v330
          %v332 = vld [vmem:[%s266 + $0x80] sm:%s259]
          %333 = vst [vmem:[%s267 + $0x80] sm:%s259] %v332
          %v334 = vld [vmem:[%s266 + $0x88] sm:%s259]
          %335 = vst [vmem:[%s267 + $0x84] sm:%s259] %v334
          %v336 = vld [vmem:[%s266 + $0x84] sm:%s259]
          %337 = vst [vmem:[%s267 + $0x88] sm:%s259] %v336
          %v338 = vld [vmem:[%s266 + $0x8c] sm:%s259]
          %339 = vst [vmem:[%s267 + $0x8c] sm:%s259] %v338
          %v340 = vld [vmem:[%s266 + $0x90] sm:%s259]
          %341 = vst [vmem:[%s267 + $0x90] sm:%s259] %v340
          %v342 = vld [vmem:[%s266 + $0x98] sm:%s259]
          %343 = vst [vmem:[%s267 + $0x94] sm:%s259] %v342
          %v344 = vld [vmem:[%s266 + $0x94] sm:%s259]
          %345 = vst [vmem:[%s267 + $0x98] sm:%s259] %v344
          %v346 = vld [vmem:[%s266 + $0x9c] sm:%s259]
          %347 = vst [vmem:[%s267 + $0x9c] sm:%s259] %v346
          %v348 = vld [vmem:[%s266 + $0xa0] sm:%s259]
          %349 = vst [vmem:[%s267 + $0xa0] sm:%s259] %v348
          %v350 = vld [vmem:[%s266 + $0xa8] sm:%s259]
          %351 = vst [vmem:[%s267 + $0xa4] sm:%s259] %v350
          %v352 = vld [vmem:[%s266 + $0xa4] sm:%s259]
          %353 = vst [vmem:[%s267 + $0xa8] sm:%s259] %v352
          %v354 = vld [vmem:[%s266 + $0xac] sm:%s259]
          %355 = vst [vmem:[%s267 + $0xac] sm:%s259] %v354
          %v356 = vld [vmem:[%s266 + $0xb0] sm:%s259]
          %357 = vst [vmem:[%s267 + $0xb0] sm:%s259] %v356
          %v358 = vld [vmem:[%s266 + $0xb8] sm:%s259]
          %359 = vst [vmem:[%s267 + $0xb4] sm:%s259] %v358
          %v360 = vld [vmem:[%s266 + $0xb4] sm:%s259]
          %361 = vst [vmem:[%s267 + $0xb8] sm:%s259] %v360
          %v362 = vld [vmem:[%s266 + $0xbc] sm:%s259]
          %363 = vst [vmem:[%s267 + $0xbc] sm:%s259] %v362
          %v364 = vld [vmem:[%s266 + $0xc0] sm:%s259]
          %365 = vst [vmem:[%s267 + $0xc0] sm:%s259] %v364
          %v366 = vld [vmem:[%s266 + $0xc8] sm:%s259]
          %367 = vst [vmem:[%s267 + $0xc4] sm:%s259] %v366
          %v368 = vld [vmem:[%s266 + $0xc4] sm:%s259]
          %369 = vst [vmem:[%s267 + $0xc8] sm:%s259] %v368
          %v370 = vld [vmem:[%s266 + $0xcc] sm:%s259]
          %371 = vst [vmem:[%s267 + $0xcc] sm:%s259] %v370
          %v372 = vld [vmem:[%s266 + $0xd0] sm:%s259]
          %373 = vst [vmem:[%s267 + $0xd0] sm:%s259] %v372
          %v374 = vld [vmem:[%s266 + $0xd8] sm:%s259]
          %375 = vst [vmem:[%s267 + $0xd4] sm:%s259] %v374
          %v376 = vld [vmem:[%s266 + $0xd4] sm:%s259]
          %377 = vst [vmem:[%s267 + $0xd8] sm:%s259] %v376
          %v378 = vld [vmem:[%s266 + $0xdc] sm:%s259]
          %379 = vst [vmem:[%s267 + $0xdc] sm:%s259] %v378
          %v380 = vld [vmem:[%s266 + $0xe0] sm:%s259]
          %381 = vst [vmem:[%s267 + $0xe0] sm:%s259] %v380
          %v382 = vld [vmem:[%s266 + $0xe8] sm:%s259]
          %383 = vst [vmem:[%s267 + $0xe4] sm:%s259] %v382
          %v384 = vld [vmem:[%s266 + $0xe4] sm:%s259]
          %385 = vst [vmem:[%s267 + $0xe8] sm:%s259] %v384
          %v386 = vld [vmem:[%s266 + $0xec] sm:%s259]
          %387 = vst [vmem:[%s267 + $0xec] sm:%s259] %v386
          %v388 = vld [vmem:[%s266 + $0xf0] sm:%s259]
          %389 = vst [vmem:[%s267 + $0xf0] sm:%s259] %v388
          %v390 = vld [vmem:[%s266 + $0xf8] sm:%s259]
          %391 = vst [vmem:[%s267 + $0xf4] sm:%s259] %v390
          %v392 = vld [vmem:[%s266 + $0xf4] sm:%s259]
          %393 = vst [vmem:[%s267 + $0xf8] sm:%s259] %v392
          %v394 = vld [vmem:[%s266 + $0xfc] sm:%s259]
          %395 = vst [vmem:[%s267 + $0xfc] sm:%s259] %v394
          %v396 = vld [vmem:[%s266 + $0x100] sm:%s259]
          %397 = vst [vmem:[%s267 + $0x100] sm:%s259] %v396
          %v398 = vld [vmem:[%s266 + $0x108] sm:%s259]
          %399 = vst [vmem:[%s267 + $0x104] sm:%s259] %v398
          %v400 = vld [vmem:[%s266 + $0x104] sm:%s259]
          %401 = vst [vmem:[%s267 + $0x108] sm:%s259] %v400
          %v402 = vld [vmem:[%s266 + $0x10c] sm:%s259]
          %403 = vst [vmem:[%s267 + $0x10c] sm:%s259] %v402
          %v404 = vld [vmem:[%s266 + $0x110] sm:%s259]
          %405 = vst [vmem:[%s267 + $0x110] sm:%s259] %v404
          %v406 = vld [vmem:[%s266 + $0x118] sm:%s259]
          %407 = vst [vmem:[%s267 + $0x114] sm:%s259] %v406
          %v408 = vld [vmem:[%s266 + $0x114] sm:%s259]
          %409 = vst [vmem:[%s267 + $0x118] sm:%s259] %v408
          %v410 = vld [vmem:[%s266 + $0x11c] sm:%s259]
          %411 = vst [vmem:[%s267 + $0x11c] sm:%s259] %v410
          %v412 = vld [vmem:[%s266 + $0x120] sm:%s259]
          %413 = vst [vmem:[%s267 + $0x120] sm:%s259] %v412
          %v414 = vld [vmem:[%s266 + $0x128] sm:%s259]
          %415 = vst [vmem:[%s267 + $0x124] sm:%s259] %v414
          %v416 = vld [vmem:[%s266 + $0x124] sm:%s259]
          %417 = vst [vmem:[%s267 + $0x128] sm:%s259] %v416
          %v418 = vld [vmem:[%s266 + $0x12c] sm:%s259]
          %419 = vst [vmem:[%s267 + $0x12c] sm:%s259] %v418
          %v420 = vld [vmem:[%s266 + $0x130] sm:%s259]
          %421 = vst [vmem:[%s267 + $0x130] sm:%s259] %v420
          %v422 = vld [vmem:[%s266 + $0x138] sm:%s259]
          %423 = vst [vmem:[%s267 + $0x134] sm:%s259] %v422
          %v424 = vld [vmem:[%s266 + $0x134] sm:%s259]
          %425 = vst [vmem:[%s267 + $0x138] sm:%s259] %v424
          %v426 = vld [vmem:[%s266 + $0x13c] sm:%s259]
          %427 = vst [vmem:[%s267 + $0x13c] sm:%s259] %v426
          %v428 = vld [vmem:[%s266 + $0x140] sm:%s259]
          %429 = vst [vmem:[%s267 + $0x140] sm:%s259] %v428
          %v430 = vld [vmem:[%s266 + $0x148] sm:%s259]
          %431 = vst [vmem:[%s267 + $0x144] sm:%s259] %v430
          %v432 = vld [vmem:[%s266 + $0x144] sm:%s259]
          %433 = vst [vmem:[%s267 + $0x148] sm:%s259] %v432
          %v434 = vld [vmem:[%s266 + $0x14c] sm:%s259]
          %435 = vst [vmem:[%s267 + $0x14c] sm:%s259] %v434
          %v436 = vld [vmem:[%s266 + $0x150] sm:%s259]
          %437 = vst [vmem:[%s267 + $0x150] sm:%s259] %v436
          %v438 = vld [vmem:[%s266 + $0x158] sm:%s259]
          %439 = vst [vmem:[%s267 + $0x154] sm:%s259] %v438
          %v440 = vld [vmem:[%s266 + $0x154] sm:%s259]
          %441 = vst [vmem:[%s267 + $0x158] sm:%s259] %v440
          %v442 = vld [vmem:[%s266 + $0x15c] sm:%s259]
          %443 = vst [vmem:[%s267 + $0x15c] sm:%s259] %v442
          %v444 = vld [vmem:[%s266 + $0x160] sm:%s259]
          %445 = vst [vmem:[%s267 + $0x160] sm:%s259] %v444
          %v446 = vld [vmem:[%s266 + $0x168] sm:%s259]
          %447 = vst [vmem:[%s267 + $0x164] sm:%s259] %v446
          %v448 = vld [vmem:[%s266 + $0x164] sm:%s259]
          %449 = vst [vmem:[%s267 + $0x168] sm:%s259] %v448
          %v450 = vld [vmem:[%s266 + $0x16c] sm:%s259]
          %451 = vst [vmem:[%s267 + $0x16c] sm:%s259] %v450
          %v452 = vld [vmem:[%s266 + $0x170] sm:%s259]
          %453 = vst [vmem:[%s267 + $0x170] sm:%s259] %v452
          %v454 = vld [vmem:[%s266 + $0x178] sm:%s259]
          %455 = vst [vmem:[%s267 + $0x174] sm:%s259] %v454
          %v456 = vld [vmem:[%s266 + $0x174] sm:%s259]
          %457 = vst [vmem:[%s267 + $0x178] sm:%s259] %v456
          %v458 = vld [vmem:[%s266 + $0x17c] sm:%s259]
          %459 = vst [vmem:[%s267 + $0x17c] sm:%s259] %v458
          %v460 = vld [vmem:[%s266 + $0x180] sm:%s259]
          %461 = vst [vmem:[%s267 + $0x180] sm:%s259] %v460
          %v462 = vld [vmem:[%s266 + $0x188] sm:%s259]
          %463 = vst [vmem:[%s267 + $0x184] sm:%s259] %v462
          %v464 = vld [vmem:[%s266 + $0x184] sm:%s259]
          %465 = vst [vmem:[%s267 + $0x188] sm:%s259] %v464
          %v466 = vld [vmem:[%s266 + $0x18c] sm:%s259]
          %467 = vst [vmem:[%s267 + $0x18c] sm:%s259] %v466
          %v468 = vld [vmem:[%s266 + $0x190] sm:%s259]
          %469 = vst [vmem:[%s267 + $0x190] sm:%s259] %v468
          %v470 = vld [vmem:[%s266 + $0x198] sm:%s259]
          %471 = vst [vmem:[%s267 + $0x194] sm:%s259] %v470
          %v472 = vld [vmem:[%s266 + $0x194] sm:%s259]
          %473 = vst [vmem:[%s267 + $0x198] sm:%s259] %v472
          %v474 = vld [vmem:[%s266 + $0x19c] sm:%s259]
          %475 = vst [vmem:[%s267 + $0x19c] sm:%s259] %v474
        $region44: #{forward.1} parent=31 // loop_footer
          %s265 = sadd.s32 1, %s261
        $region45: #{forward.1} parent=31 // loop_footer_branch
          %260 = sbr.rel target = $region41
        $region46: #{forward.1} parent=31 // loop_exit
          _
      $region32: #{forward.1} parent=16 // pred_fallthru
        _
    $region17: #{forward.1} parent=1 // pred_fallthru
      _
    // Predicated region
    $region18: #{forward.1} parent=1 // pred_check
      %p21 = pneg %p17
    $region19: #{forward.1} parent=1 // pred_check_branch
      %23 = sbr.rel (%p21) target = $region21
    $region20: #{forward.1} parent=1 // pred_region
      %s24 = sshllo.u32 0, 4
      loop: start=0, step=1, limit=1
      $region22: #{forward.1} parent=20 // loop_pre_header
        _
      $region23: #{forward.1} parent=20 // loop_header
        %s26 = sphi 0, %s30
        %p27 = scmp.ge.s32.totalorder %s26, 1
        %s31 = sphi %s3, %s3
        %s32 = sphi [#allocation2], [#allocation2]
      $region24: #{forward.1} parent=20 // loop_header_branch
        %29 = sbr.rel (%p27) target = $region28
      $region25: #{forward.1} parent=20 // loop_body
        %v33 = vld [vmem:[%s31] sm:%s24]
        %34 = vst [vmem:[%s32] sm:%s24] %v33
        %v35 = vld [vmem:[%s31 + $0x8] sm:%s24]
        %36 = vst [vmem:[%s32 + $0x4] sm:%s24] %v35
        %v37 = vld [vmem:[%s31 + $0x4] sm:%s24]
        %38 = vst [vmem:[%s32 + $0x8] sm:%s24] %v37
        %v39 = vld [vmem:[%s31 + $0xc] sm:%s24]
        %40 = vst [vmem:[%s32 + $0xc] sm:%s24] %v39
        %v41 = vld [vmem:[%s31 + $0x10] sm:%s24]
        %42 = vst [vmem:[%s32 + $0x10] sm:%s24] %v41
        %v43 = vld [vmem:[%s31 + $0x18] sm:%s24]
        %44 = vst [vmem:[%s32 + $0x14] sm:%s24] %v43
        %v45 = vld [vmem:[%s31 + $0x14] sm:%s24]
        %46 = vst [vmem:[%s32 + $0x18] sm:%s24] %v45
        %v47 = vld [vmem:[%s31 + $0x1c] sm:%s24]
        %48 = vst [vmem:[%s32 + $0x1c] sm:%s24] %v47
        %v49 = vld [vmem:[%s31 + $0x20] sm:%s24]
        %50 = vst [vmem:[%s32 + $0x20] sm:%s24] %v49
        %v51 = vld [vmem:[%s31 + $0x28] sm:%s24]
        %52 = vst [vmem:[%s32 + $0x24] sm:%s24] %v51
        %v53 = vld [vmem:[%s31 + $0x24] sm:%s24]
        %54 = vst [vmem:[%s32 + $0x28] sm:%s24] %v53
        %v55 = vld [vmem:[%s31 + $0x2c] sm:%s24]
        %56 = vst [vmem:[%s32 + $0x2c] sm:%s24] %v55
        %v57 = vld [vmem:[%s31 + $0x30] sm:%s24]
        %58 = vst [vmem:[%s32 + $0x30] sm:%s24] %v57
        %v59 = vld [vmem:[%s31 + $0x38] sm:%s24]
        %60 = vst [vmem:[%s32 + $0x34] sm:%s24] %v59
        %v61 = vld [vmem:[%s31 + $0x34] sm:%s24]
        %62 = vst [vmem:[%s32 + $0x38] sm:%s24] %v61
        %v63 = vld [vmem:[%s31 + $0x3c] sm:%s24]
        %64 = vst [vmem:[%s32 + $0x3c] sm:%s24] %v63
        %v65 = vld [vmem:[%s31 + $0x40] sm:%s24]
        %66 = vst [vmem:[%s32 + $0x40] sm:%s24] %v65
        %v67 = vld [vmem:[%s31 + $0x48] sm:%s24]
        %68 = vst [vmem:[%s32 + $0x44] sm:%s24] %v67
        %v69 = vld [vmem:[%s31 + $0x44] sm:%s24]
        %70 = vst [vmem:[%s32 + $0x48] sm:%s24] %v69
        %v71 = vld [vmem:[%s31 + $0x4c] sm:%s24]
        %72 = vst [vmem:[%s32 + $0x4c] sm:%s24] %v71
        %v73 = vld [vmem:[%s31 + $0x50] sm:%s24]
        %74 = vst [vmem:[%s32 + $0x50] sm:%s24] %v73
        %v75 = vld [vmem:[%s31 + $0x58] sm:%s24]
        %76 = vst [vmem:[%s32 + $0x54] sm:%s24] %v75
        %v77 = vld [vmem:[%s31 + $0x54] sm:%s24]
        %78 = vst [vmem:[%s32 + $0x58] sm:%s24] %v77
        %v79 = vld [vmem:[%s31 + $0x5c] sm:%s24]
        %80 = vst [vmem:[%s32 + $0x5c] sm:%s24] %v79
        %v81 = vld [vmem:[%s31 + $0x60] sm:%s24]
        %82 = vst [vmem:[%s32 + $0x60] sm:%s24] %v81
        %v83 = vld [vmem:[%s31 + $0x68] sm:%s24]
        %84 = vst [vmem:[%s32 + $0x64] sm:%s24] %v83
        %v85 = vld [vmem:[%s31 + $0x64] sm:%s24]
        %86 = vst [vmem:[%s32 + $0x68] sm:%s24] %v85
        %v87 = vld [vmem:[%s31 + $0x6c] sm:%s24]
        %88 = vst [vmem:[%s32 + $0x6c] sm:%s24] %v87
        %v89 = vld [vmem:[%s31 + $0x70] sm:%s24]
        %90 = vst [vmem:[%s32 + $0x70] sm:%s24] %v89
        %v91 = vld [vmem:[%s31 + $0x78] sm:%s24]
        %92 = vst [vmem:[%s32 + $0x74] sm:%s24] %v91
        %v93 = vld [vmem:[%s31 + $0x74] sm:%s24]
        %94 = vst [vmem:[%s32 + $0x78] sm:%s24] %v93
        %v95 = vld [vmem:[%s31 + $0x7c] sm:%s24]
        %96 = vst [vmem:[%s32 + $0x7c] sm:%s24] %v95
        %v97 = vld [vmem:[%s31 + $0x80] sm:%s24]
        %98 = vst [vmem:[%s32 + $0x80] sm:%s24] %v97
        %v99 = vld [vmem:[%s31 + $0x88] sm:%s24]
        %100 = vst [vmem:[%s32 + $0x84] sm:%s24] %v99
        %v101 = vld [vmem:[%s31 + $0x84] sm:%s24]
        %102 = vst [vmem:[%s32 + $0x88] sm:%s24] %v101
        %v103 = vld [vmem:[%s31 + $0x8c] sm:%s24]
        %104 = vst [vmem:[%s32 + $0x8c] sm:%s24] %v103
        %v105 = vld [vmem:[%s31 + $0x90] sm:%s24]
        %106 = vst [vmem:[%s32 + $0x90] sm:%s24] %v105
        %v107 = vld [vmem:[%s31 + $0x98] sm:%s24]
        %108 = vst [vmem:[%s32 + $0x94] sm:%s24] %v107
        %v109 = vld [vmem:[%s31 + $0x94] sm:%s24]
        %110 = vst [vmem:[%s32 + $0x98] sm:%s24] %v109
        %v111 = vld [vmem:[%s31 + $0x9c] sm:%s24]
        %112 = vst [vmem:[%s32 + $0x9c] sm:%s24] %v111
        %v113 = vld [vmem:[%s31 + $0xa0] sm:%s24]
        %114 = vst [vmem:[%s32 + $0xa0] sm:%s24] %v113
        %v115 = vld [vmem:[%s31 + $0xa8] sm:%s24]
        %116 = vst [vmem:[%s32 + $0xa4] sm:%s24] %v115
        %v117 = vld [vmem:[%s31 + $0xa4] sm:%s24]
        %118 = vst [vmem:[%s32 + $0xa8] sm:%s24] %v117
        %v119 = vld [vmem:[%s31 + $0xac] sm:%s24]
        %120 = vst [vmem:[%s32 + $0xac] sm:%s24] %v119
        %v121 = vld [vmem:[%s31 + $0xb0] sm:%s24]
        %122 = vst [vmem:[%s32 + $0xb0] sm:%s24] %v121
        %v123 = vld [vmem:[%s31 + $0xb8] sm:%s24]
        %124 = vst [vmem:[%s32 + $0xb4] sm:%s24] %v123
        %v125 = vld [vmem:[%s31 + $0xb4] sm:%s24]
        %126 = vst [vmem:[%s32 + $0xb8] sm:%s24] %v125
        %v127 = vld [vmem:[%s31 + $0xbc] sm:%s24]
        %128 = vst [vmem:[%s32 + $0xbc] sm:%s24] %v127
        %v129 = vld [vmem:[%s31 + $0xc0] sm:%s24]
        %130 = vst [vmem:[%s32 + $0xc0] sm:%s24] %v129
        %v131 = vld [vmem:[%s31 + $0xc8] sm:%s24]
        %132 = vst [vmem:[%s32 + $0xc4] sm:%s24] %v131
        %v133 = vld [vmem:[%s31 + $0xc4] sm:%s24]
        %134 = vst [vmem:[%s32 + $0xc8] sm:%s24] %v133
        %v135 = vld [vmem:[%s31 + $0xcc] sm:%s24]
        %136 = vst [vmem:[%s32 + $0xcc] sm:%s24] %v135
        %v137 = vld [vmem:[%s31 + $0xd0] sm:%s24]
        %138 = vst [vmem:[%s32 + $0xd0] sm:%s24] %v137
        %v139 = vld [vmem:[%s31 + $0xd8] sm:%s24]
        %140 = vst [vmem:[%s32 + $0xd4] sm:%s24] %v139
        %v141 = vld [vmem:[%s31 + $0xd4] sm:%s24]
        %142 = vst [vmem:[%s32 + $0xd8] sm:%s24] %v141
        %v143 = vld [vmem:[%s31 + $0xdc] sm:%s24]
        %144 = vst [vmem:[%s32 + $0xdc] sm:%s24] %v143
        %v145 = vld [vmem:[%s31 + $0xe0] sm:%s24]
        %146 = vst [vmem:[%s32 + $0xe0] sm:%s24] %v145
        %v147 = vld [vmem:[%s31 + $0xe8] sm:%s24]
        %148 = vst [vmem:[%s32 + $0xe4] sm:%s24] %v147
        %v149 = vld [vmem:[%s31 + $0xe4] sm:%s24]
        %150 = vst [vmem:[%s32 + $0xe8] sm:%s24] %v149
        %v151 = vld [vmem:[%s31 + $0xec] sm:%s24]
        %152 = vst [vmem:[%s32 + $0xec] sm:%s24] %v151
        %v153 = vld [vmem:[%s31 + $0xf0] sm:%s24]
        %154 = vst [vmem:[%s32 + $0xf0] sm:%s24] %v153
        %v155 = vld [vmem:[%s31 + $0xf8] sm:%s24]
        %156 = vst [vmem:[%s32 + $0xf4] sm:%s24] %v155
        %v157 = vld [vmem:[%s31 + $0xf4] sm:%s24]
        %158 = vst [vmem:[%s32 + $0xf8] sm:%s24] %v157
        %v159 = vld [vmem:[%s31 + $0xfc] sm:%s24]
        %160 = vst [vmem:[%s32 + $0xfc] sm:%s24] %v159
        %v161 = vld [vmem:[%s31 + $0x100] sm:%s24]
        %162 = vst [vmem:[%s32 + $0x100] sm:%s24] %v161
        %v163 = vld [vmem:[%s31 + $0x108] sm:%s24]
        %164 = vst [vmem:[%s32 + $0x104] sm:%s24] %v163
        %v165 = vld [vmem:[%s31 + $0x104] sm:%s24]
        %166 = vst [vmem:[%s32 + $0x108] sm:%s24] %v165
        %v167 = vld [vmem:[%s31 + $0x10c] sm:%s24]
        %168 = vst [vmem:[%s32 + $0x10c] sm:%s24] %v167
        %v169 = vld [vmem:[%s31 + $0x110] sm:%s24]
        %170 = vst [vmem:[%s32 + $0x110] sm:%s24] %v169
        %v171 = vld [vmem:[%s31 + $0x118] sm:%s24]
        %172 = vst [vmem:[%s32 + $0x114] sm:%s24] %v171
        %v173 = vld [vmem:[%s31 + $0x114] sm:%s24]
        %174 = vst [vmem:[%s32 + $0x118] sm:%s24] %v173
        %v175 = vld [vmem:[%s31 + $0x11c] sm:%s24]
        %176 = vst [vmem:[%s32 + $0x11c] sm:%s24] %v175
        %v177 = vld [vmem:[%s31 + $0x120] sm:%s24]
        %178 = vst [vmem:[%s32 + $0x120] sm:%s24] %v177
        %v179 = vld [vmem:[%s31 + $0x128] sm:%s24]
        %180 = vst [vmem:[%s32 + $0x124] sm:%s24] %v179
        %v181 = vld [vmem:[%s31 + $0x124] sm:%s24]
        %182 = vst [vmem:[%s32 + $0x128] sm:%s24] %v181
        %v183 = vld [vmem:[%s31 + $0x12c] sm:%s24]
        %184 = vst [vmem:[%s32 + $0x12c] sm:%s24] %v183
        %v185 = vld [vmem:[%s31 + $0x130] sm:%s24]
        %186 = vst [vmem:[%s32 + $0x130] sm:%s24] %v185
        %v187 = vld [vmem:[%s31 + $0x138] sm:%s24]
        %188 = vst [vmem:[%s32 + $0x134] sm:%s24] %v187
        %v189 = vld [vmem:[%s31 + $0x134] sm:%s24]
        %190 = vst [vmem:[%s32 + $0x138] sm:%s24] %v189
        %v191 = vld [vmem:[%s31 + $0x13c] sm:%s24]
        %192 = vst [vmem:[%s32 + $0x13c] sm:%s24] %v191
        %v193 = vld [vmem:[%s31 + $0x140] sm:%s24]
        %194 = vst [vmem:[%s32 + $0x140] sm:%s24] %v193
        %v195 = vld [vmem:[%s31 + $0x148] sm:%s24]
        %196 = vst [vmem:[%s32 + $0x144] sm:%s24] %v195
        %v197 = vld [vmem:[%s31 + $0x144] sm:%s24]
        %198 = vst [vmem:[%s32 + $0x148] sm:%s24] %v197
        %v199 = vld [vmem:[%s31 + $0x14c] sm:%s24]
        %200 = vst [vmem:[%s32 + $0x14c] sm:%s24] %v199
        %v201 = vld [vmem:[%s31 + $0x150] sm:%s24]
        %202 = vst [vmem:[%s32 + $0x150] sm:%s24] %v201
        %v203 = vld [vmem:[%s31 + $0x158] sm:%s24]
        %204 = vst [vmem:[%s32 + $0x154] sm:%s24] %v203
        %v205 = vld [vmem:[%s31 + $0x154] sm:%s24]
        %206 = vst [vmem:[%s32 + $0x158] sm:%s24] %v205
        %v207 = vld [vmem:[%s31 + $0x15c] sm:%s24]
        %208 = vst [vmem:[%s32 + $0x15c] sm:%s24] %v207
        %v209 = vld [vmem:[%s31 + $0x160] sm:%s24]
        %210 = vst [vmem:[%s32 + $0x160] sm:%s24] %v209
        %v211 = vld [vmem:[%s31 + $0x168] sm:%s24]
        %212 = vst [vmem:[%s32 + $0x164] sm:%s24] %v211
        %v213 = vld [vmem:[%s31 + $0x164] sm:%s24]
        %214 = vst [vmem:[%s32 + $0x168] sm:%s24] %v213
        %v215 = vld [vmem:[%s31 + $0x16c] sm:%s24]
        %216 = vst [vmem:[%s32 + $0x16c] sm:%s24] %v215
        %v217 = vld [vmem:[%s31 + $0x170] sm:%s24]
        %218 = vst [vmem:[%s32 + $0x170] sm:%s24] %v217
        %v219 = vld [vmem:[%s31 + $0x178] sm:%s24]
        %220 = vst [vmem:[%s32 + $0x174] sm:%s24] %v219
        %v221 = vld [vmem:[%s31 + $0x174] sm:%s24]
        %222 = vst [vmem:[%s32 + $0x178] sm:%s24] %v221
        %v223 = vld [vmem:[%s31 + $0x17c] sm:%s24]
        %224 = vst [vmem:[%s32 + $0x17c] sm:%s24] %v223
        %v225 = vld [vmem:[%s31 + $0x180] sm:%s24]
        %226 = vst [vmem:[%s32 + $0x180] sm:%s24] %v225
        %v227 = vld [vmem:[%s31 + $0x188] sm:%s24]
        %228 = vst [vmem:[%s32 + $0x184] sm:%s24] %v227
        %v229 = vld [vmem:[%s31 + $0x184] sm:%s24]
        %230 = vst [vmem:[%s32 + $0x188] sm:%s24] %v229
        %v231 = vld [vmem:[%s31 + $0x18c] sm:%s24]
        %232 = vst [vmem:[%s32 + $0x18c] sm:%s24] %v231
        %v233 = vld [vmem:[%s31 + $0x190] sm:%s24]
        %234 = vst [vmem:[%s32 + $0x190] sm:%s24] %v233
        %v235 = vld [vmem:[%s31 + $0x198] sm:%s24]
        %236 = vst [vmem:[%s32 + $0x194] sm:%s24] %v235
        %v237 = vld [vmem:[%s31 + $0x194] sm:%s24]
        %238 = vst [vmem:[%s32 + $0x198] sm:%s24] %v237
        %v239 = vld [vmem:[%s31 + $0x19c] sm:%s24]
        %240 = vst [vmem:[%s32 + $0x19c] sm:%s24] %v239
      $region26: #{forward.1} parent=20 // loop_footer
        %s30 = sadd.s32 1, %s26
      $region27: #{forward.1} parent=20 // loop_footer_branch
        %25 = sbr.rel target = $region23
      $region28: #{forward.1} parent=20 // loop_exit
        _
    $region21: #{forward.1} parent=1 // pred_fallthru
      _
    // Predicated region
    $region47: #{forward.1} parent=1 // pred_check
      _
    $region48: #{forward.1} parent=1 // pred_check_branch
      %478 = sbr.rel (0) target = $region50
    $region49: #{forward.1} parent=1 // pred_region
      %479 = vsyncadd [#allocation3], 6656
    $region50: #{forward.1} parent=1 // pred_fallthru
      _
    %v480 = vld [vmem:[%s0] sm:$0xff]
    %v481 = vld [vmem:[%s1] sm:$0xff]
    %v482 = vld [vmem:[%s2] sm:$0xff]
    %v483 = vld [vmem:[%s2 + $0x8] sm:$0xff]
    %vm484 = vcmask 80896
    %v485 = vsel %vm484, %v480, -inf
    %486 = vmax.xlane.f32.xlu0 %v485
    %v487 = vpop.xlane.xlu0 %486
    %v488 = vsub.f32 %v480, %v487
    %v489 = vmul.f32 %v488, 1.442695
    %v490 = vpow.pop %v489
    %v491 = vsel %vm484, %v490, 0.0
    %492 = vadd.xlane.f32.xlu0 %v491
    %v493 = vpop.xlane.xlu0 %492
    %v494 = vlog2.pop %v493
    %v495 = vmul.f32 %v494, 0.6931472
    %v496 = vsub.f32 %v488, %v495
    %v497 = vsel %vm484, %v481, -inf
    %498 = vmax.xlane.f32.xlu0 %v497
    %v499 = vpop.xlane.xlu0 %498
    %v500 = vsub.f32 %v481, %v499
    %v501 = vmul.f32 %v500, 1.442695
    %v502 = vpow.pop %v501
    %v503 = vsel %vm484, %v502, 0.0
    %504 = vadd.xlane.f32.xlu0 %v503
    %v505 = vpop.xlane.xlu0 %504
    %v506 = vlog2.pop %v505
    %v507 = vmul.f32 %v506, 0.6931472
    %v508 = vsub.f32 %v500, %v507
    %v509 = vmul.f32 %v508, 1.442695
    %v510 = vpow.pop %v509
    %v511 = vmul.f32 %v510, %v508
    %v512 = vsel %vm484, %v511, 0.0
    %513 = vadd.xlane.f32.xlu0 %v512
    %v514 = vpop.xlane.xlu0 %513
    %v515 = vrcp.pop 10.0
    %v516 = vmul.f32 %v514, %v515
    %v517 = vmul.f32 %v510, %v496
    %v518 = vsel %vm484, %v517, 0.0
    %519 = vadd.xlane.f32.xlu0 %v518
    %v520 = vpop.xlane.xlu0 %519
    %v521 = vmul.f32 %v520, %v515
    %v522 = vsub.f32 %v516, %v521
    %v523 = vlaneseq
    %v524 = vshrl.u32 %v523, 7
    %v525 = vsub.s32 4, %v524
    %v526 = vrot.slane %v482, %v525
    %v527 = vadd.f32 %v480, %v526
    %v528 = vsel %vm484, %v527, -inf
    %529 = vmax.xlane.f32.xlu0 %v528
    %v530 = vpop.xlane.xlu0 %529
    %v531 = vsub.f32 %v527, %v530
    %v532 = vmul.f32 %v531, 1.442695
    %v533 = vpow.pop %v532
    %v534 = vsel %vm484, %v533, 0.0
    %535 = vadd.xlane.f32.xlu0 %v534
    %v536 = vpop.xlane.xlu0 %535
    %v537 = vlog2.pop %v536
    %v538 = vmul.f32 %v537, 0.6931472
    %v539 = vsub.f32 %v531, %v538
    %v540 = vmul.f32 %v510, %v539
    %v541 = vsel %vm484, %v540, 0.0
    %542 = vadd.xlane.f32.xlu0 %v541
    %v543 = vpop.xlane.xlu0 %542
    %v544 = vmul.f32 %v543, %v515
    %v545 = vsub.f32 %v516, %v544
    %s546 = smul.u32 4, 52
    %s547 = smul.u32 %s546, 2
    %s548 = sshll.u32 %s547, 4
    %549 = dma.done [#allocation3], %s548
    %v550 = vld [vmem:[#allocation2] sm:$0x1f]
    %v551 = vld [vmem:[#allocation2 + $0x8] sm:$0x1f]
    %v552 = vunpack.c.l.bf16 %v550
    %v553 = vunpack.c.l.bf16 %v551
    %v554 = vunpack.c.h.bf16 %v550
    %v555 = vunpack.c.h.bf16 %v551
    %v556 = vld [vmem:[#allocation2 + $0x10] sm:$0x1f]
    %v557 = vld [vmem:[#allocation2 + $0x18] sm:$0x1f]
    %v558 = vunpack.c.l.bf16 %v556
    %v559 = vunpack.c.l.bf16 %v557
    %v560 = vunpack.c.h.bf16 %v556
    %v561 = vunpack.c.h.bf16 %v557
    %v563 = vsel %vm484, %v481, 0
    %vm565 = vcmask 1041408
    %v567 = vsel %vm565, %v560, 0
    %v570 = vsel %vm565, %v561, 0
    %572 = vmatprep.subr.mxu0 %v559
    %573 = vmatpush1.msra.mxu0 %v558
    %574 = vmatprep.subr.mxu0 %v570
    %575 = vmatpush1.msra.mxu0 %v567
    %576 = vmatprep.subr.mxu0 0.0
    %577 = vmatpush1.msra.mxu0 0.0
    %578 = vmatprep.subr.mxu0 0.0
    %579 = vmatpush1.msra.mxu0 0.0
    %580 = vmatprep.subr.mxu0 0.0
    %581 = vmatpush1.msra.mxu0 0.0
    %582 = vmatprep.subr.mxu0 0.0
    %583 = vmatpush1.msra.mxu0 0.0
    %584 = vmatprep.subr.mxu0 0.0
    %585 = vmatpush1.msra.mxu0 0.0
    %586 = vmatprep.subr.mxu0 0.0
    %587 = vmatpush1.msra.mxu0 0.0
    %588 = vmatprep.subr.mxu0 0.0
    %589 = vmatpush1.msra.mxu0 0.0
    %590 = vmatprep.subr.mxu0 0.0
    %591 = vmatpush1.msra.mxu0 0.0
    %592 = vmatprep.subr.mxu0 0.0
    %593 = vmatpush1.msra.mxu0 0.0
    %594 = vmatprep.subr.mxu0 0.0
    %595 = vmatpush1.msra.mxu0 0.0
    %596 = vmatprep.subr.mxu0 0.0
    %597 = vmatpush1.msra.mxu0 0.0
    %598 = vmatprep.subr.mxu0 0.0
    %599 = vmatpush1.msra.mxu0 0.0
    %600 = vmatprep.subr.mxu0 0.0
    %601 = vmatpush1.msra.mxu0 0.0
    %602 = vmatprep.subr.mxu0 0.0
    %603 = vmatpush1.msra.mxu0 0.0
    %604 = vmatprep.subr.mxu0 0.0
    %605 = vmatpush1.msra.mxu0 0.0
    %606 = vmatprep.subr.mxu0 0.0
    %607 = vmatpush1.msra.mxu0 0.0
    %608 = vmatprep.subr.mxu0 0.0
    %609 = vmatpush1.msra.mxu0 0.0
    %610 = vmatprep.subr.mxu0 0.0
    %611 = vmatpush1.msra.mxu0 0.0
    %612 = vmatprep.subr.mxu0 0.0
    %613 = vmatpush1.msra.mxu0 0.0
    %614 = vmatprep.subr.mxu0 0.0
    %615 = vmatpush1.msra.mxu0 0.0
    %616 = vmatprep.subr.mxu0 0.0
    %617 = vmatpush1.msra.mxu0 0.0
    %618 = vmatprep.subr.mxu0 0.0
    %619 = vmatpush1.msra.mxu0 0.0
    %620 = vmatprep.subr.mxu0 0.0
    %621 = vmatpush1.msra.mxu0 0.0
    %622 = vmatprep.subr.mxu0 0.0
    %623 = vmatpush1.msra.mxu0 0.0
    %624 = vmatprep.subr.mxu0 0.0
    %625 = vmatpush1.msra.mxu0 0.0
    %626 = vmatprep.subr.mxu0 0.0
    %627 = vmatpush1.msra.mxu0 0.0
    %628 = vmatprep.subr.mxu0 0.0
    %629 = vmatpush1.msra.mxu0 0.0
    %630 = vmatprep.subr.mxu0 0.0
    %631 = vmatpush1.msra.mxu0 0.0
    %632 = vmatprep.subr.mxu0 0.0
    %633 = vmatpush1.msra.mxu0 0.0
    %634 = vmatprep.subr.mxu0 0.0
    %635 = vmatpush1.msra.mxu0 0.0
    %636 = vmatprep.mubr.f32.mxu0 0.0
    %637 = vmatmul.mubr.f32.gmra.mrb[0].mxu0 %v563
    %v638 = vpop.f32.mrb[0].mxu0
    %v639 = vadd.f32 0.0, %v638
    %v640 = vpop.f32.mrb[0].mxu0
    %v641 = vadd.f32 0.0, %v640
    %642 = vdwg.mxu0
    %v644 = vsel %vm484, %v480, 0
    %v647 = vsel %vm565, %v554, 0
    %v650 = vsel %vm565, %v555, 0
    %652 = vmatprep.subr.mxu0 %v553
    %653 = vmatpush1.msra.mxu0 %v552
    %654 = vmatprep.subr.mxu0 %v650
    %655 = vmatpush1.msra.mxu0 %v647
    %656 = vmatprep.subr.mxu0 0.0
    %657 = vmatpush1.msra.mxu0 0.0
    %658 = vmatprep.subr.mxu0 0.0
    %659 = vmatpush1.msra.mxu0 0.0
    %660 = vmatprep.subr.mxu0 0.0
    %661 = vmatpush1.msra.mxu0 0.0
    %662 = vmatprep.subr.mxu0 0.0
    %663 = vmatpush1.msra.mxu0 0.0
    %664 = vmatprep.subr.mxu0 0.0
    %665 = vmatpush1.msra.mxu0 0.0
    %666 = vmatprep.subr.mxu0 0.0
    %667 = vmatpush1.msra.mxu0 0.0
    %668 = vmatprep.subr.mxu0 0.0
    %669 = vmatpush1.msra.mxu0 0.0
    %670 = vmatprep.subr.mxu0 0.0
    %671 = vmatpush1.msra.mxu0 0.0
    %672 = vmatprep.subr.mxu0 0.0
    %673 = vmatpush1.msra.mxu0 0.0
    %674 = vmatprep.subr.mxu0 0.0
    %675 = vmatpush1.msra.mxu0 0.0
    %676 = vmatprep.subr.mxu0 0.0
    %677 = vmatpush1.msra.mxu0 0.0
    %678 = vmatprep.subr.mxu0 0.0
    %679 = vmatpush1.msra.mxu0 0.0
    %680 = vmatprep.subr.mxu0 0.0
    %681 = vmatpush1.msra.mxu0 0.0
    %682 = vmatprep.subr.mxu0 0.0
    %683 = vmatpush1.msra.mxu0 0.0
    %684 = vmatprep.subr.mxu0 0.0
    %685 = vmatpush1.msra.mxu0 0.0
    %686 = vmatprep.subr.mxu0 0.0
    %687 = vmatpush1.msra.mxu0 0.0
    %688 = vmatprep.subr.mxu0 0.0
    %689 = vmatpush1.msra.mxu0 0.0
    %690 = vmatprep.subr.mxu0 0.0
    %691 = vmatpush1.msra.mxu0 0.0
    %692 = vmatprep.subr.mxu0 0.0
    %693 = vmatpush1.msra.mxu0 0.0
    %694 = vmatprep.subr.mxu0 0.0
    %695 = vmatpush1.msra.mxu0 0.0
    %696 = vmatprep.subr.mxu0 0.0
    %697 = vmatpush1.msra.mxu0 0.0
    %698 = vmatprep.subr.mxu0 0.0
    %699 = vmatpush1.msra.mxu0 0.0
    %700 = vmatprep.subr.mxu0 0.0
    %701 = vmatpush1.msra.mxu0 0.0
    %702 = vmatprep.subr.mxu0 0.0
    %703 = vmatpush1.msra.mxu0 0.0
    %704 = vmatprep.subr.mxu0 0.0
    %705 = vmatpush1.msra.mxu0 0.0
    %706 = vmatprep.subr.mxu0 0.0
    %707 = vmatpush1.msra.mxu0 0.0
    %708 = vmatprep.subr.mxu0 0.0
    %709 = vmatpush1.msra.mxu0 0.0
    %710 = vmatprep.subr.mxu0 0.0
    %711 = vmatpush1.msra.mxu0 0.0
    %712 = vmatprep.subr.mxu0 0.0
    %713 = vmatpush1.msra.mxu0 0.0
    %714 = vmatprep.subr.mxu0 0.0
    %715 = vmatpush1.msra.mxu0 0.0
    %716 = vmatprep.mubr.f32.mxu0 0.0
    %717 = vmatmul.mubr.f32.gmra.mrb[0].mxu0 %v644
    %v718 = vpop.f32.mrb[0].mxu0
    %v719 = vadd.f32 %v639, %v718
    %v720 = vpop.f32.mrb[0].mxu0
    %v721 = vadd.f32 %v641, %v720
    %722 = vdwg.mxu0
    %v723 = vlaneseq
    %v724 = vshrl.u32 %v723, 7
    %v725 = vsub.s32 0, %v724
    %v726 = vrot.slane %v482, %v725
    %v727 = vlaneseq
    %v728 = vshrl.u32 %v727, 7
    %v729 = vsub.s32 0, %v728
    %v730 = vrot.slane %v483, %v729
    %v731 = vadd.f32 %v719, %v726
    %v732 = vadd.f32 %v721, %v730
    %v733 = vrot.slane %v731, 4
    %v734 = vadd.f32 %v731, %v733
    %v735 = vrot.slane %v734, 2
    %v736 = vadd.f32 %v734, %v735
    %v737 = vrot.slane %v736, 1
    %v738 = vadd.f32 %v736, %v737
    %vm739 = vcmask 588800
    %v740 = vsel %vm739, %v732, 0.0
    %v741 = vrot.slane %v740, 4
    %v742 = vadd.f32 %v740, %v741
    %v743 = vrot.slane %v742, 2
    %v744 = vadd.f32 %v742, %v743
    %v745 = vrot.slane %v744, 1
    %v746 = vadd.f32 %v744, %v745
    %v747 = vrcp.pop 8.0
    %v748 = vmul.f32 %v738, %v747
    %v749 = vmul.f32 %v746, %v747
    %v750 = vsub.f32 %v731, %v748
    %v751 = vsub.f32 %v732, %v749
    %v752 = vmul.f32 %v750, %v750
    %v753 = vmul.f32 %v751, %v751
    %v754 = vrot.slane %v752, 4
    %v755 = vadd.f32 %v752, %v754
    %v756 = vrot.slane %v755, 2
    %v757 = vadd.f32 %v755, %v756
    %v758 = vrot.slane %v757, 1
    %v759 = vadd.f32 %v757, %v758
    %v760 = vsel %vm739, %v753, 0.0
    %v761 = vrot.slane %v760, 4
    %v762 = vadd.f32 %v760, %v761
    %v763 = vrot.slane %v762, 2
    %v764 = vadd.f32 %v762, %v763
    %v765 = vrot.slane %v764, 1
    %v766 = vadd.f32 %v764, %v765
    %v767 = vmul.f32 %v759, %v747
    %v768 = vmul.f32 %v766, %v747
    %v769 = vadd.f32 %v767, 1e-05
    %v770 = vadd.f32 %v768, 1e-05
    %v771 = vrsqrt.pop %v769
    %v772 = vrsqrt.pop %v770
    %v773 = vmul.f32 %v750, %v771
    %v774 = vmul.f32 %v751, %v772
    %v775 = vmax.f32 %v773, 0.0
    %v776 = vmax.f32 %v774, 0.0
    %v777 = vld [vmem:[#allocation2 + $0x20] sm:$0xff]
    %v778 = vld [vmem:[#allocation2 + $0x30] sm:$0xff]
    %v779 = vld [vmem:[#allocation2 + $0x40] sm:$0xff]
    %v780 = vld [vmem:[#allocation2 + $0x50] sm:$0xff]
    %v781 = vld [vmem:[#allocation2 + $0x60] sm:$0xff]
    %v782 = vld [vmem:[#allocation2 + $0x70] sm:$0xff]
    %v783 = vld [vmem:[#allocation2 + $0x80] sm:$0xff]
    %v784 = vld [vmem:[#allocation2 + $0x90] sm:$0xff]
    %v785 = vld [vmem:[#allocation2 + $0xa0] sm:$0xff]
    %v786 = vld [vmem:[#allocation2 + $0xb0] sm:$0xff]
    %v787 = vld [vmem:[#allocation2 + $0xc0] sm:$0xff]
    %v788 = vld [vmem:[#allocation2 + $0xd0] sm:$0xff]
    %v789 = vld [vmem:[#allocation2 + $0xe0] sm:$0xf]
    %v790 = vunpack.c.l.bf16 %v777
    %v791 = vunpack.c.h.bf16 %v777
    %v792 = vunpack.c.l.bf16 %v778
    %v793 = vunpack.c.h.bf16 %v778
    %v794 = vunpack.c.l.bf16 %v779
    %v795 = vunpack.c.h.bf16 %v779
    %v796 = vunpack.c.l.bf16 %v780
    %v797 = vunpack.c.h.bf16 %v780
    %v798 = vunpack.c.l.bf16 %v781
    %v799 = vunpack.c.h.bf16 %v781
    %v800 = vunpack.c.l.bf16 %v782
    %v801 = vunpack.c.h.bf16 %v782
    %v802 = vunpack.c.l.bf16 %v783
    %v803 = vunpack.c.h.bf16 %v783
    %v804 = vunpack.c.l.bf16 %v784
    %v805 = vunpack.c.h.bf16 %v784
    %v806 = vunpack.c.l.bf16 %v785
    %v807 = vunpack.c.h.bf16 %v785
    %v808 = vunpack.c.l.bf16 %v786
    %v809 = vunpack.c.h.bf16 %v786
    %v810 = vunpack.c.l.bf16 %v787
    %v811 = vunpack.c.h.bf16 %v787
    %v812 = vunpack.c.l.bf16 %v788
    %v813 = vunpack.c.h.bf16 %v788
    %v814 = vunpack.c.l.bf16 %v789
    %v815 = vlaneseq
    %v816 = vshrl.u32 %v815, 7
    %v817 = vsub.s32 1, %v816
    %v818 = vrot.slane %v482, %v817
    %v820 = vsel %vm739, %v776, 0
    %822 = vmatprep.subr.mxu0 0.0
    %823 = vmatpush1.msra.mxu0 %v790
    %824 = vmatprep.subr.mxu0 0.0
    %825 = vmatpush1.msra.mxu0 %v791
    %826 = vmatprep.subr.mxu0 0.0
    %827 = vmatpush1.msra.mxu0 %v792
    %828 = vmatprep.subr.mxu0 0.0
    %829 = vmatpush1.msra.mxu0 %v793
    %830 = vmatprep.subr.mxu0 0.0
    %831 = vmatpush1.msra.mxu0 %v794
    %832 = vmatprep.subr.mxu0 0.0
    %833 = vmatpush1.msra.mxu0 %v795
    %834 = vmatprep.subr.mxu0 0.0
    %835 = vmatpush1.msra.mxu0 %v796
    %836 = vmatprep.subr.mxu0 0.0
    %837 = vmatpush1.msra.mxu0 %v797
    %838 = vmatprep.subr.mxu0 0.0
    %839 = vmatpush1.msra.mxu0 %v798
    %840 = vmatprep.subr.mxu0 0.0
    %841 = vmatpush1.msra.mxu0 %v799
    %842 = vmatprep.subr.mxu0 0.0
    %843 = vmatpush1.msra.mxu0 %v800
    %844 = vmatprep.subr.mxu0 0.0
    %845 = vmatpush1.msra.mxu0 %v801
    %846 = vmatprep.subr.mxu0 0.0
    %847 = vmatpush1.msra.mxu0 %v802
    %848 = vmatprep.subr.mxu0 0.0
    %849 = vmatpush1.msra.mxu0 %v803
    %850 = vmatprep.subr.mxu0 0.0
    %851 = vmatpush1.msra.mxu0 %v804
    %852 = vmatprep.subr.mxu0 0.0
    %853 = vmatpush1.msra.mxu0 %v805
    %854 = vmatprep.subr.mxu0 0.0
    %855 = vmatpush1.msra.mxu0 %v806
    %856 = vmatprep.subr.mxu0 0.0
    %857 = vmatpush1.msra.mxu0 %v807
    %858 = vmatprep.subr.mxu0 0.0
    %859 = vmatpush1.msra.mxu0 %v808
    %860 = vmatprep.subr.mxu0 0.0
    %861 = vmatpush1.msra.mxu0 %v809
    %862 = vmatprep.subr.mxu0 0.0
    %863 = vmatpush1.msra.mxu0 %v810
    %864 = vmatprep.subr.mxu0 0.0
    %865 = vmatpush1.msra.mxu0 %v811
    %866 = vmatprep.subr.mxu0 0.0
    %867 = vmatpush1.msra.mxu0 %v812
    %868 = vmatprep.subr.mxu0 0.0
    %869 = vmatpush1.msra.mxu0 %v813
    %870 = vmatprep.subr.mxu0 0.0
    %871 = vmatpush1.msra.mxu0 %v814
    %872 = vmatprep.subr.mxu0 0.0
    %873 = vmatpush1.msra.mxu0 0.0
    %874 = vmatprep.subr.mxu0 0.0
    %875 = vmatpush1.msra.mxu0 0.0
    %876 = vmatprep.subr.mxu0 0.0
    %877 = vmatpush1.msra.mxu0 0.0
    %878 = vmatprep.subr.mxu0 0.0
    %879 = vmatpush1.msra.mxu0 0.0
    %880 = vmatprep.subr.mxu0 0.0
    %881 = vmatpush1.msra.mxu0 0.0
    %882 = vmatprep.subr.mxu0 0.0
    %883 = vmatpush1.msra.mxu0 0.0
    %884 = vmatprep.subr.mxu0 0.0
    %885 = vmatpush1.msra.mxu0 0.0
    %886 = vmatprep.mubr.f32.mxu0 %v820
    %887 = vmatmul.mubr.f32.gmra.mrb[0].mxu0 %v775
    %v888 = vpop.f32.mrb[0].mxu0
    %v889 = vadd.f32 %v818, %v888
    %v890 = vpop.f32.mrb[0].mxu0
    %891 = vdwg.mxu0
    %vm892 = vcmask 818176
    %v893 = vsel %vm892, %v889, 0.0
    %v894 = vrot.slane %v893, 4
    %v895 = vadd.f32 %v893, %v894
    %v896 = vrot.slane %v895, 2
    %v897 = vadd.f32 %v895, %v896
    %v898 = vrot.slane %v897, 1
    %v899 = vadd.f32 %v897, %v898
    %v900 = vmul.f32 %v899, %v747
    %v901 = vsub.f32 %v889, %v900
    %v902 = vmul.f32 %v901, %v901
    %v903 = vsel %vm892, %v902, 0.0
    %v904 = vrot.slane %v903, 4
    %v905 = vadd.f32 %v903, %v904
    %v906 = vrot.slane %v905, 2
    %v907 = vadd.f32 %v905, %v906
    %v908 = vrot.slane %v907, 1
    %v909 = vadd.f32 %v907, %v908
    %v910 = vmul.f32 %v909, %v747
    %v911 = vadd.f32 %v910, 1e-05
    %v912 = vrsqrt.pop %v911
    %v913 = vmul.f32 %v901, %v912
    %v914 = vmax.f32 %v913, 0.0
    %v915 = vld [vmem:[#allocation2 + $0xf0] sm:$0xff]
    %v916 = vld [vmem:[#allocation2 + $0x100] sm:$0xff]
    %v917 = vld [vmem:[#allocation2 + $0x110] sm:$0xff]
    %v918 = vld [vmem:[#allocation2 + $0x120] sm:$0xff]
    %v919 = vld [vmem:[#allocation2 + $0x130] sm:$0xff]
    %v920 = vld [vmem:[#allocation2 + $0x140] sm:$0xff]
    %v921 = vld [vmem:[#allocation2 + $0x150] sm:$0x3]
    %v922 = vunpack.c.l.bf16 %v915
    %v923 = vunpack.c.h.bf16 %v915
    %v924 = vunpack.c.l.bf16 %v916
    %v925 = vunpack.c.h.bf16 %v916
    %v926 = vunpack.c.l.bf16 %v917
    %v927 = vunpack.c.h.bf16 %v917
    %v928 = vunpack.c.l.bf16 %v918
    %v929 = vunpack.c.h.bf16 %v918
    %v930 = vunpack.c.l.bf16 %v919
    %v931 = vunpack.c.h.bf16 %v919
    %v932 = vunpack.c.l.bf16 %v920
    %v933 = vunpack.c.h.bf16 %v920
    %v934 = vunpack.c.l.bf16 %v921
    %v935 = vlaneseq
    %v936 = vshrl.u32 %v935, 7
    %v937 = vsub.s32 2, %v936
    %v938 = vrot.slane %v482, %v937
    %v940 = vsel %vm892, %v914, 0
    %vm942 = vcmask 1043456
    %v944 = vsel %vm942, %v934, 0
    %946 = vmatprep.subr.mxu0 0.0
    %947 = vmatpush1.msra.mxu0 %v922
    %948 = vmatprep.subr.mxu0 0.0
    %949 = vmatpush1.msra.mxu0 %v923
    %950 = vmatprep.subr.mxu0 0.0
    %951 = vmatpush1.msra.mxu0 %v924
    %952 = vmatprep.subr.mxu0 0.0
    %953 = vmatpush1.msra.mxu0 %v925
    %954 = vmatprep.subr.mxu0 0.0
    %955 = vmatpush1.msra.mxu0 %v926
    %956 = vmatprep.subr.mxu0 0.0
    %957 = vmatpush1.msra.mxu0 %v927
    %958 = vmatprep.subr.mxu0 0.0
    %959 = vmatpush1.msra.mxu0 %v928
    %960 = vmatprep.subr.mxu0 0.0
    %961 = vmatpush1.msra.mxu0 %v929
    %962 = vmatprep.subr.mxu0 0.0
    %963 = vmatpush1.msra.mxu0 %v930
    %964 = vmatprep.subr.mxu0 0.0
    %965 = vmatpush1.msra.mxu0 %v931
    %966 = vmatprep.subr.mxu0 0.0
    %967 = vmatpush1.msra.mxu0 %v932
    %968 = vmatprep.subr.mxu0 0.0
    %969 = vmatpush1.msra.mxu0 %v933
    %970 = vmatprep.subr.mxu0 0.0
    %971 = vmatpush1.msra.mxu0 %v944
    %972 = vmatprep.subr.mxu0 0.0
    %973 = vmatpush1.msra.mxu0 0.0
    %974 = vmatprep.subr.mxu0 0.0
    %975 = vmatpush1.msra.mxu0 0.0
    %976 = vmatprep.subr.mxu0 0.0
    %977 = vmatpush1.msra.mxu0 0.0
    %978 = vmatprep.subr.mxu0 0.0
    %979 = vmatpush1.msra.mxu0 0.0
    %980 = vmatprep.subr.mxu0 0.0
    %981 = vmatpush1.msra.mxu0 0.0
    %982 = vmatprep.subr.mxu0 0.0
    %983 = vmatpush1.msra.mxu0 0.0
    %984 = vmatprep.subr.mxu0 0.0
    %985 = vmatpush1.msra.mxu0 0.0
    %986 = vmatprep.subr.mxu0 0.0
    %987 = vmatpush1.msra.mxu0 0.0
    %988 = vmatprep.subr.mxu0 0.0
    %989 = vmatpush1.msra.mxu0 0.0
    %990 = vmatprep.subr.mxu0 0.0
    %991 = vmatpush1.msra.mxu0 0.0
    %992 = vmatprep.subr.mxu0 0.0
    %993 = vmatpush1.msra.mxu0 0.0
    %994 = vmatprep.subr.mxu0 0.0
    %995 = vmatpush1.msra.mxu0 0.0
    %996 = vmatprep.subr.mxu0 0.0
    %997 = vmatpush1.msra.mxu0 0.0
    %998 = vmatprep.subr.mxu0 0.0
    %999 = vmatpush1.msra.mxu0 0.0
    %1000 = vmatprep.subr.mxu0 0.0
    %1001 = vmatpush1.msra.mxu0 0.0
    %1002 = vmatprep.subr.mxu0 0.0
    %1003 = vmatpush1.msra.mxu0 0.0
    %1004 = vmatprep.subr.mxu0 0.0
    %1005 = vmatpush1.msra.mxu0 0.0
    %1006 = vmatprep.subr.mxu0 0.0
    %1007 = vmatpush1.msra.mxu0 0.0
    %1008 = vmatprep.subr.mxu0 0.0
    %1009 = vmatpush1.msra.mxu0 0.0
    %1010 = vmatprep.mubr.f32.mxu0 0.0
    %1011 = vmatmul.mubr.f32.gmra.mrb[0].mxu0 %v940
    %v1012 = vpop.f32.mrb[0].mxu0
    %v1013 = vadd.f32 %v938, %v1012
    %v1014 = vpop.f32.mrb[0].mxu0
    %1015 = vdwg.mxu0
    %vm1016 = vcmask 408576
    %v1017 = vsel %vm1016, %v1013, 0.0
    %v1018 = vrot.slane %v1017, 4
    %v1019 = vadd.f32 %v1017, %v1018
    %v1020 = vrot.slane %v1019, 2
    %v1021 = vadd.f32 %v1019, %v1020
    %v1022 = vrot.slane %v1021, 1
    %v1023 = vadd.f32 %v1021, %v1022
    %v1024 = vmul.f32 %v1023, %v747
    %v1025 = vsub.f32 %v1013, %v1024
    %v1026 = vmul.f32 %v1025, %v1025
    %v1027 = vsel %vm1016, %v1026, 0.0
    %v1028 = vrot.slane %v1027, 4
    %v1029 = vadd.f32 %v1027, %v1028
    %v1030 = vrot.slane %v1029, 2
    %v1031 = vadd.f32 %v1029, %v1030
    %v1032 = vrot.slane %v1031, 1
    %v1033 = vadd.f32 %v1031, %v1032
    %v1034 = vmul.f32 %v1033, %v747
    %v1035 = vadd.f32 %v1034, 1e-05
    %v1036 = vrsqrt.pop %v1035
    %v1037 = vmul.f32 %v1025, %v1036
    %v1038 = vmax.f32 %v1037, 0.0
    %v1039 = vld [vmem:[#allocation2 + $0x160] sm:$0xff]
    %v1040 = vld [vmem:[#allocation2 + $0x170] sm:$0xff]
    %v1041 = vld [vmem:[#allocation2 + $0x180] sm:$0xff]
    %v1042 = vld [vmem:[#allocation2 + $0x190] sm:$0x1]
    %v1043 = vunpack.c.l.bf16 %v1039
    %v1044 = vunpack.c.h.bf16 %v1039
    %v1045 = vunpack.c.l.bf16 %v1040
    %v1046 = vunpack.c.h.bf16 %v1040
    %v1047 = vunpack.c.l.bf16 %v1041
    %v1048 = vunpack.c.h.bf16 %v1041
    %v1049 = vunpack.c.l.bf16 %v1042
    %v1050 = vlaneseq
    %v1051 = vshrl.u32 %v1050, 7
    %v1052 = vsub.s32 3, %v1051
    %v1053 = vrot.slane %v482, %v1052
    %v1055 = vsel %vm1016, %v1038, 0
    %v1058 = vsel %vm565, %v1049, 0
    %1060 = vmatprep.subr.mxu0 0.0
    %1061 = vmatpush1.msra.mxu0 %v1043
    %1062 = vmatprep.subr.mxu0 0.0
    %1063 = vmatpush1.msra.mxu0 %v1044
    %1064 = vmatprep.subr.mxu0 0.0
    %1065 = vmatpush1.msra.mxu0 %v1045
    %1066 = vmatprep.subr.mxu0 0.0
    %1067 = vmatpush1.msra.mxu0 %v1046
    %1068 = vmatprep.subr.mxu0 0.0
    %1069 = vmatpush1.msra.mxu0 %v1047
    %1070 = vmatprep.subr.mxu0 0.0
    %1071 = vmatpush1.msra.mxu0 %v1048
    %1072 = vmatprep.subr.mxu0 0.0
    %1073 = vmatpush1.msra.mxu0 %v1058
    %1074 = vmatprep.subr.mxu0 0.0
    %1075 = vmatpush1.msra.mxu0 0.0
    %1076 = vmatprep.subr.mxu0 0.0
    %1077 = vmatpush1.msra.mxu0 0.0
    %1078 = vmatprep.subr.mxu0 0.0
    %1079 = vmatpush1.msra.mxu0 0.0
    %1080 = vmatprep.subr.mxu0 0.0
    %1081 = vmatpush1.msra.mxu0 0.0
    %1082 = vmatprep.subr.mxu0 0.0
    %1083 = vmatpush1.msra.mxu0 0.0
    %1084 = vmatprep.subr.mxu0 0.0
    %1085 = vmatpush1.msra.mxu0 0.0
    %1086 = vmatprep.subr.mxu0 0.0
    %1087 = vmatpush1.msra.mxu0 0.0
    %1088 = vmatprep.subr.mxu0 0.0
    %1089 = vmatpush1.msra.mxu0 0.0
    %1090 = vmatprep.subr.mxu0 0.0
    %1091 = vmatpush1.msra.mxu0 0.0
    %1092 = vmatprep.subr.mxu0 0.0
    %1093 = vmatpush1.msra.mxu0 0.0
    %1094 = vmatprep.subr.mxu0 0.0
    %1095 = vmatpush1.msra.mxu0 0.0
    %1096 = vmatprep.subr.mxu0 0.0
    %1097 = vmatpush1.msra.mxu0 0.0
    %1098 = vmatprep.subr.mxu0 0.0
    %1099 = vmatpush1.msra.mxu0 0.0
    %1100 = vmatprep.subr.mxu0 0.0
    %1101 = vmatpush1.msra.mxu0 0.0
    %1102 = vmatprep.subr.mxu0 0.0
    %1103 = vmatpush1.msra.mxu0 0.0
    %1104 = vmatprep.subr.mxu0 0.0
    %1105 = vmatpush1.msra.mxu0 0.0
    %1106 = vmatprep.subr.mxu0 0.0
    %1107 = vmatpush1.msra.mxu0 0.0
    %1108 = vmatprep.subr.mxu0 0.0
    %1109 = vmatpush1.msra.mxu0 0.0
    %1110 = vmatprep.subr.mxu0 0.0
    %1111 = vmatpush1.msra.mxu0 0.0
    %1112 = vmatprep.subr.mxu0 0.0
    %1113 = vmatpush1.msra.mxu0 0.0
    %1114 = vmatprep.subr.mxu0 0.0
    %1115 = vmatpush1.msra.mxu0 0.0
    %1116 = vmatprep.subr.mxu0 0.0
    %1117 = vmatpush1.msra.mxu0 0.0
    %1118 = vmatprep.subr.mxu0 0.0
    %1119 = vmatpush1.msra.mxu0 0.0
    %1120 = vmatprep.subr.mxu0 0.0
    %1121 = vmatpush1.msra.mxu0 0.0
    %1122 = vmatprep.subr.mxu0 0.0
    %1123 = vmatpush1.msra.mxu0 0.0
    %1124 = vmatprep.mubr.f32.mxu0 0.0
    %1125 = vmatmul.mubr.f32.gmra.mrb[0].mxu0 %v1055
    %v1126 = vpop.f32.mrb[0].mxu0
    %v1127 = vadd.f32 %v1053, %v1126
    %v1128 = vpop.f32.mrb[0].mxu0
    %1129 = vdwg.mxu0
    %1131 = vrot.lane.b32.xlu0 %v1127, 127
    %v1132 = vpop.permute.xlu0 %1131
    %v1134 = vsub.f32 %v1127, %v1132
    %v1135 = vsub.f32 0.0, %v1134
    %v1136 = vmul.f32 %v1135, 1.442695
    %v1137 = vpow.pop %v1136
    %v1138 = vadd.f32 %v1137, 1.0
    %v1139 = vrcp.pop %v1138
    %v1140 = vmul.f32 1.0, %v1139
    %v1141 = vsub.f32 1.0, %v1140
    %v1142 = vmul.f32 %v522, %v1140
    %v1143 = vmul.f32 %v545, %v1141
    %v1144 = vadd.f32 %v1142, %v1143
    %vm1145 = vcmask 7168
    %v1146 = vsel %vm1145, %v1144, 0.0
    %v1147 = vrot.slane %v1146, 4
    %v1148 = vadd.f32 %v1146, %v1147
    %v1149 = vrot.slane %v1148, 2
    %v1150 = vadd.f32 %v1148, %v1149
    %v1151 = vrot.slane %v1150, 1
    %v1152 = vadd.f32 %v1150, %v1151
    %v1153 = vmul.f32 %v1152, %v747
    %vm1154 = vcmask 0
    %1155 = vst.msk [vmem:[#allocation4] sm:$0x1] %vm1154, %v1153
    // Predicated region
    $region51: #{forward.1} parent=1 // pred_check
      _
    $region52: #{forward.1} parent=1 // pred_check_branch
      %1157 = sbr.rel (0) target = $region54
    $region53: #{forward.1} parent=1 // pred_region
      %s1159 = ssub.s32 16, 16
      %1160 = vsyncadd [#allocation5], %s1159
      %s1162 = sshll.u32 [#allocation4], 4
      %s1163 = int_to_ptr.vmem [resolvable:$true] %s1162
      %1165 = dma.vmem_to_hbm [thread:$0]  %s1163, 16, %s4, [#allocation5]
    $region54: #{forward.1} parent=1 // pred_fallthru
      _
    // Predicated region
    $region55: #{forward.1} parent=1 // pred_check
      _
    $region56: #{forward.1} parent=1 // pred_check_branch
      %1167 = sbr.rel (0) target = $region58
    $region57: #{forward.1} parent=1 // pred_region
      %1168 = dma.done [#allocation5], 16
    $region58: #{forward.1} parent=1 // pred_fallthru
      _
    %1169 = vsyncpa [#allocation5], 1
  %1170 = vsyncmov [#allocation3]
  %s1171 = vpop.sfrf %1170
  %p1172 = scmp.eq.s32.totalorder %s1171, 0
  %p1173 = pneg %p1172
  %1175 = shalt.err (%p1173)

</llo_original>
